<compile_context>
chip_gen: v7x
topology: tpu7x:2x2x1
jax: 0.10.0
libtpu: 0.0.40
codegen_flags: <defaults>
</compile_context>

<pallas_src>
import functools
from typing import NamedTuple

import jax
import jax.numpy as jnp
from jax.experimental import pallas as pl
from jax.experimental.pallas import tpu as pltpu

HIDDEN = 512
BN_EPS = 1e-5


def _round_up(x, m):
    return ((x + m - 1) // m) * m


def _pad_cast_2d(a, rows, cols, dtype):
    """Cast (and zero-pad only if needed) a 2-D array to (rows, cols)."""
    r, c = a.shape
    if r == rows and c == cols:
        return a.astype(dtype)
    return jnp.zeros((rows, cols), dtype).at[:r, :c].set(a.astype(dtype))


class PreparedParams(NamedTuple):
    w1: jax.Array
    b1: jax.Array
    w2: jax.Array
    b2: jax.Array
    w3: jax.Array
    b3: jax.Array
    gamma: jax.Array
    beta: jax.Array
    in_dim: int
    out_dim: int
    in_p: int
    out_p: int


def prepare_params(params, in_dim, out_dim):
    """Pad feature dims to multiples of 128 and cast weights to bf16 — ONCE.

    Call this at init / parameter-update time and reuse the result across
    forward calls (hoists the per-call re-padding flagged in the perf review).
    """
    w1, b1, w2, b2, w3, b3, gamma, beta = params
    in_p = _round_up(in_dim, 128)
    out_p = _round_up(out_dim, 128)
    bf16, f32 = jnp.bfloat16, jnp.float32
    return PreparedParams(
        w1=_pad_cast_2d(w1, in_p, HIDDEN, bf16),
        b1=b1.reshape(1, HIDDEN).astype(f32),
        w2=w2.astype(bf16),
        b2=b2.reshape(1, HIDDEN).astype(f32),
        w3=_pad_cast_2d(w3, HIDDEN, out_p, bf16),
        b3=_pad_cast_2d(b3.reshape(1, out_dim), 1, out_p, f32),
        gamma=_pad_cast_2d(gamma.reshape(1, out_dim), 1, out_p, f32),
        beta=_pad_cast_2d(beta.reshape(1, out_dim), 1, out_p, f32),
        in_dim=in_dim, out_dim=out_dim, in_p=in_p, out_p=out_p,
    )


# ---------------------------------------------------------------------------
# Fused path: MLP + global BatchNorm (stats + apply) in a single kernel.
# Everything (weights, x, h1/h2/h3, out) is VMEM-resident; no grid.
# ---------------------------------------------------------------------------
def _fused_mlp_bn_kernel(x_ref, w1_ref, b1_ref, w2_ref, b2_ref, w3_ref, b3_ref,
                         gamma_ref, beta_ref, o_ref, *, batch):
    # bf16 operands on the MXU, f32 accumulation; bias/ReLU/BN in f32.
    h1 = jnp.dot(x_ref[...], w1_ref[...],
                 preferred_element_type=jnp.float32) + b1_ref[...]
    h1 = jnp.maximum(h1, 0.0)
    h2 = jnp.dot(h1.astype(jnp.bfloat16), w2_ref[...],
                 preferred_element_type=jnp.float32) + b2_ref[...]
    h2 = jnp.maximum(h2, 0.0)
    h3 = jnp.dot(h2.astype(jnp.bfloat16), w3_ref[...],
                 preferred_element_type=jnp.float32) + b3_ref[...]

    # Global BatchNorm statistics over the true batch only (mask padded rows).
    rows = jax.lax.broadcasted_iota(jnp.int32, (h3.shape[0], 1), 0)
    valid = rows < batch
    inv_b = jnp.float32(1.0 / batch)
    mean = jnp.sum(jnp.where(valid, h3, 0.0), axis=0, keepdims=True) * inv_b
    centered = jnp.where(valid, h3 - mean, 0.0)
    var = jnp.sum(centered * centered, axis=0, keepdims=True) * inv_b  # biased, two-pass
    inv_std = jax.lax.rsqrt(var + BN_EPS)
    o_ref[...] = ((h3 - mean) * (gamma_ref[...] * inv_std)
                  + beta_ref[...]).astype(o_ref.dtype)


# ---------------------------------------------------------------------------
# Tiled path, pass 1: fused 3-layer MLP + per-tile BatchNorm partial stats.
# h3 is emitted in bf16; stats are computed from the bf16-rounded values so
# the normalization is self-consistent with what the apply step reads.
# ---------------------------------------------------------------------------
def _mlp_stats_kernel(x_ref, w1_ref, b1_ref, w2_ref, b2_ref, w3_ref, b3_ref,
                      h3_ref, sum_ref, sumsq_ref, *, batch, tile):
    h1 = jnp.dot(x_ref[...], w1_ref[...],
                 preferred_element_type=jnp.float32) + b1_ref[...]
    h1 = jnp.maximum(h1, 0.0)
    h2 = jnp.dot(h1.astype(jnp.bfloat16), w2_ref[...],
                 preferred_element_type=jnp.float32) + b2_ref[...]
    h2 = jnp.maximum(h2, 0.0)
    h3 = jnp.dot(h2.astype(jnp.bfloat16), w3_ref[...],
                 preferred_element_type=jnp.float32) + b3_ref[...]

    h3_bf = h3.astype(jnp.bfloat16)
    h3_ref[...] = h3_bf

    # Per-tile partial statistics over real rows only (f32 accumulation).
    rows = (pl.program_id(0) * tile
            + jax.lax.broadcasted_iota(jnp.int32, (tile, 1), 0))
    h3s = jnp.where(rows < batch, h3_bf.astype(jnp.float32), 0.0)
    sum_ref[...] = jnp.sum(h3s, axis=0, keepdims=True)
    sumsq_ref[...] = jnp.sum(h3s * h3s, axis=0, keepdims=True)


def textual_inversion_mlp(x, prepared: PreparedParams, *, force_tiled=False):
    """x: (B, in_dim) f32 -> (B, out_dim) f32 using pre-padded/cast params."""
    B, in_dim = x.shape
    assert in_dim == prepared.in_dim
    in_p, out_p, out_dim = prepared.in_p, prepared.out_p, prepared.out_dim
    f32, bf16 = jnp.float32, jnp.bfloat16

    weight_bytes = ((in_p * HIDDEN + HIDDEN * HIDDEN + HIDDEN * out_p) * 2
                    + (2 * HIDDEN + 3 * out_p) * 4)
    mlp_flops_per_row = 2 * (in_p * HIDDEN + HIDDEN * HIDDEN + HIDDEN * out_p)

    # ----------------- Fused single-call path (typical PromptSG batches) -----
    b_f = _round_up(B, 8)
    fused_act_bytes = b_f * (in_p * 2 + 2 * HIDDEN * 4 + 3 * out_p * 4)
    if not force_tiled and weight_bytes + fused_act_bytes <= (24 << 20):
        x_p = _pad_cast_2d(x, b_f, in_p, bf16)
        vmem_limit = int(min(weight_bytes + fused_act_bytes + (8 << 20), 32 << 20))
        out = pl.pallas_call(
            functools.partial(_fused_mlp_bn_kernel, batch=B),
            out_shape=jax.ShapeDtypeStruct((b_f, out_p), f32),
            in_specs=[pl.BlockSpec(memory_space=pltpu.MemorySpace.VMEM)] * 9,
            out_specs=pl.BlockSpec(memory_space=pltpu.MemorySpace.VMEM),
            compiler_params=pltpu.CompilerParams(vmem_limit_bytes=vmem_limit),
            cost_estimate=pl.CostEstimate(
                flops=b_f * mlp_flops_per_row + 8 * b_f * out_p,
                transcendentals=0,
                bytes_accessed=(b_f * in_p * 2 + weight_bytes + b_f * out_p * 4)),
        )(x_p, prepared.w1, prepared.b1, prepared.w2, prepared.b2,
          prepared.w3, prepared.b3, prepared.gamma, prepared.beta)
        return out[:B, :out_dim]

    # ----------------- Tiled two-stage path (large batches) ------------------
    # Balanced batch tiles (minimal padding); >= 2 tiles when B > 256 so both
    # v7x TensorCores get work on the "parallel" batch axis.
    n_tiles = pl.cdiv(B, 256)
    if B > 256:
        n_tiles = max(n_tiles, 2)
    tb = _round_up(pl.cdiv(B, n_tiles), 8)
    b_p = _round_up(B, tb)
    n_tiles = b_p // tb

    x_p = _pad_cast_2d(x, b_p, in_p, bf16)

    def const_spec(shape):
        nd = len(shape)
        return pl.BlockSpec(shape, lambda i, _nd=nd: (0,) * _nd)

    # VMEM footprint: double-buffered x / h3 tiles + stats tiles, weights
    # (double-buffered by the default pipeliner even though constant), and the
    # VMEM-backed h1/h2 f32 intermediates.  Capped at 32 MiB (v7x-safe).
    tile_bytes = (2 * tb * in_p * 2 + 2 * tb * out_p * 2
                  + 2 * 2 * out_p * 4 + 2 * tb * HIDDEN * 4)
    vmem_limit = int(min(2 * weight_bytes + tile_bytes + (4 << 20), 32 << 20))

    kernel = functools.partial(_mlp_stats_kernel, batch=B, tile=tb)
    h3, sums, sumsq = pl.pallas_call(
        kernel,
        out_shape=(jax.ShapeDtypeStruct((b_p, out_p), bf16),
                   jax.ShapeDtypeStruct((n_tiles, out_p), f32),
                   jax.ShapeDtypeStruct((n_tiles, out_p), f32)),
        grid_spec=pltpu.PrefetchScalarGridSpec(
            num_scalar_prefetch=0,
            grid=(n_tiles,),
            in_specs=[
                pl.BlockSpec((tb, in_p), lambda i: (i, 0)),      # x: batch-tiled
                const_spec((in_p, HIDDEN)), const_spec((1, HIDDEN)),
                const_spec((HIDDEN, HIDDEN)), const_spec((1, HIDDEN)),
                const_spec((HIDDEN, out_p)), const_spec((1, out_p)),
            ],
            out_specs=(
                pl.BlockSpec((tb, out_p), lambda i: (i, 0)),     # h3 (bf16)
                pl.BlockSpec((1, out_p), lambda i: (i, 0)),      # per-tile sum
                pl.BlockSpec((1, out_p), lambda i: (i, 0)),      # per-tile sumsq
            ),
        ),
        compiler_params=pltpu.CompilerParams(
            dimension_semantics=("parallel",),
            vmem_limit_bytes=vmem_limit,
        ),
        cost_estimate=pl.CostEstimate(
            flops=b_p * mlp_flops_per_row, transcendentals=0,
            bytes_accessed=(b_p * in_p * 2 + weight_bytes + b_p * out_p * 2
                            + 2 * n_tiles * out_p * 4)),
    )(x_p, prepared.w1, prepared.b1, prepared.w2, prepared.b2,
      prepared.w3, prepared.b3)

    # Tiny global fold + trivially mem-bound BN apply: leave to XLA and fuse it
    # with the unpadding slice (no second pallas_call, no padded-out writeback).
    mean = jnp.sum(sums, axis=0) / B
    var = jnp.maximum(jnp.sum(sumsq, axis=0) / B - mean * mean, 0.0)  # biased
    inv_std = jax.lax.rsqrt(var + BN_EPS)
    scale = prepared.gamma[0] * inv_std
    shift = prepared.beta[0] - mean * scale
    return (h3[:B, :out_dim].astype(f32) * scale[:out_dim] + shift[:out_dim])


# ---------------------------------------------------------------------------
# Parameter init + references.
# ---------------------------------------------------------------------------
def init_params(key, in_dim, out_dim):
    """Mimics nn.Linear defaults (uniform ±1/sqrt(fan_in)); weights stored as
    (fan_in, fan_out). BN: gamma=1, beta=0."""
    ks = jax.random.split(key, 6)

    def linear(kw, kb, fan_in, fan_out):
        bound = 1.0 / jnp.sqrt(fan_in)
        w = jax.random.uniform(kw, (fan_in, fan_out), jnp.float32, -bound, bound)
        b = jax.random.uniform(kb, (1, fan_out), jnp.float32, -bound, bound)
        return w, b

    w1, b1 = linear(ks[0], ks[1], in_dim, HIDDEN)
    w2, b2 = linear(ks[2], ks[3], HIDDEN, HIDDEN)
    w3, b3 = linear(ks[4], ks[5], HIDDEN, out_dim)
    gamma = jnp.ones((1, out_dim), jnp.float32)
    beta = jnp.zeros((1, out_dim), jnp.float32)
    return (w1, b1, w2, b2, w3, b3, gamma, beta)


def reference_forward(x, params):
    """Pure-f32 JAX reference matching the PyTorch forward (BN training mode)."""
    w1, b1, w2, b2, w3, b3, gamma, beta = params
    h = jnp.maximum(x @ w1 + b1, 0.0)
    h = jnp.maximum(h @ w2 + b2, 0.0)
    h = h @ w3 + b3
    mean = jnp.mean(h, axis=0, keepdims=True)
    var = jnp.mean((h - mean) ** 2, axis=0, keepdims=True)
    return (h - mean) * jax.lax.rsqrt(var + BN_EPS) * gamma + beta


def reference_forward_bf16(x, params, *, round_h3=False):
    """Reference mirroring the kernels' math: bf16 MXU operands, f32 accum/BN.
    round_h3=True additionally rounds h3 to bf16 (tiled-path semantics)."""
    w1, b1, w2, b2, w3, b3, gamma, beta = params
    bf = jnp.bfloat16
    h = jnp.dot(x.astype(bf), w1.astype(bf), preferred_element_type=jnp.float32) + b1
    h = jnp.maximum(h, 0.0)
    h = jnp.dot(h.astype(bf), w2.astype(bf), preferred_element_type=jnp.float32) + b2
    h = jnp.maximum(h, 0.0)
    h = jnp.dot(h.astype(bf), w3.astype(bf), preferred_element_type=jnp.float32) + b3
    if round_h3:
        h = h.astype(bf).astype(jnp.float32)
    mean = jnp.mean(h, axis=0, keepdims=True)
    var = jnp.mean((h - mean) ** 2, axis=0, keepdims=True)
    return (h - mean) * jax.lax.rsqrt(var + BN_EPS) * gamma + beta


if __name__ == "__main__":
    key = jax.random.PRNGKey(0)

    def run_case(k, B, in_dim, out_dim, force_tiled):
        kx, kp = jax.random.split(k)
        x = jax.random.normal(kx, (B, in_dim), jnp.float32)
        params = init_params(kp, in_dim, out_dim)
        prepared = prepare_params(params, in_dim, out_dim)   # hoisted: done once
        out = jax.block_until_ready(
            textual_inversion_mlp(x, prepared, force_tiled=force_tiled))
        assert out.shape == (B, out_dim)
        assert bool(jnp.all(jnp.isfinite(out)))
        # Tight check vs a reference using the same bf16-operand math.
        ref_bf = reference_forward_bf16(x, params, round_h3=force_tiled)
        assert jnp.allclose(out, ref_bf, atol=7e-3, rtol=7e-3), \
            f"bf16-ref mismatch (B={B}, in={in_dim}, out={out_dim}, tiled={force_tiled})"
        # Loose check vs the full-f32 PyTorch-equivalent reference.
        ref_f32 = reference_forward(x, params)
        assert jnp.allclose(out, ref_f32, atol=2e-1, rtol=1e-1), \
            f"f32-ref mismatch (B={B}, in={in_dim}, out={out_dim}, tiled={force_tiled})"

    k1, k2, k3 = jax.random.split(key, 3)
    # Fused single-call path, unaligned in_dim (exercises the padding branch).
    run_case(k1, B=8, in_dim=64, out_dim=128, force_tiled=False)
    # Tiled two-stage path (forced) on the same small shapes.
    run_case(k2, B=8, in_dim=64, out_dim=128, force_tiled=True)
    # Fused path with already-aligned dims (exercises the no-padding branch).
    run_case(k3, B=16, in_dim=128, out_dim=256, force_tiled=False)

    print("KERNEL_OK")
</pallas_src>

<mosaic_0001>
module attributes {stable_mosaic.version = 11 : i64} {
  func.func @_fused_mlp_bn_kernel(%arg0: memref<8x128xbf16, #tpu.memory_space<vmem>>, %arg1: memref<128x512xbf16, #tpu.memory_space<vmem>>, %arg2: memref<1x512xf32, #tpu.memory_space<vmem>>, %arg3: memref<512x512xbf16, #tpu.memory_space<vmem>>, %arg4: memref<1x512xf32, #tpu.memory_space<vmem>>, %arg5: memref<512x128xbf16, #tpu.memory_space<vmem>>, %arg6: memref<1x128xf32, #tpu.memory_space<vmem>>, %arg7: memref<1x128xf32, #tpu.memory_space<vmem>>, %arg8: memref<1x128xf32, #tpu.memory_space<vmem>>, %arg9: memref<8x128xf32, #tpu.memory_space<vmem>>) attributes {dimension_semantics = [], scalar_prefetch = 0 : i64, scratch_operands = 0 : i64, tpu.core_type = #tpu.core_type<tc>} {
    %c0 = arith.constant 0 : index
    %c0_0 = arith.constant 0 : index
    %0 = vector.load %arg0[%c0, %c0_0] : memref<8x128xbf16, #tpu.memory_space<vmem>>, vector<8x128xbf16>
    %c0_1 = arith.constant 0 : index
    %c0_2 = arith.constant 0 : index
    %1 = vector.load %arg1[%c0_1, %c0_2] : memref<128x512xbf16, #tpu.memory_space<vmem>>, vector<128x512xbf16>
    %cst = arith.constant dense<0.000000e+00> : vector<8x512xf32>
    %2 = tpu.matmul %0, %1, %cst {dimension_numbers = #tpu.dot_dimension_numbers<[1], [0], [0], [1], [0, 0, 1, 1], [], []>} : vector<8x128xbf16>, vector<128x512xbf16>, vector<8x512xf32> -> vector<8x512xf32>
    %c0_3 = arith.constant 0 : index
    %c0_4 = arith.constant 0 : index
    %3 = vector.load %arg2[%c0_3, %c0_4] : memref<1x512xf32, #tpu.memory_space<vmem>>, vector<1x512xf32>
    %4 = vector.broadcast %3 : vector<1x512xf32> to vector<8x512xf32>
    %5 = arith.addf %2, %4 : vector<8x512xf32>
    %cst_5 = arith.constant 0.000000e+00 : f32
    %6 = vector.broadcast %cst_5 : f32 to vector<8x512xf32>
    %7 = arith.maximumf %5, %6 : vector<8x512xf32>
    %8 = arith.truncf %7 : vector<8x512xf32> to vector<8x512xbf16>
    %c0_6 = arith.constant 0 : index
    %c0_7 = arith.constant 0 : index
    %9 = vector.load %arg3[%c0_6, %c0_7] : memref<512x512xbf16, #tpu.memory_space<vmem>>, vector<512x512xbf16>
    %cst_8 = arith.constant dense<0.000000e+00> : vector<8x512xf32>
    %10 = tpu.matmul %8, %9, %cst_8 {dimension_numbers = #tpu.dot_dimension_numbers<[1], [0], [0], [1], [0, 0, 1, 1], [], []>} : vector<8x512xbf16>, vector<512x512xbf16>, vector<8x512xf32> -> vector<8x512xf32>
    %c0_9 = arith.constant 0 : index
    %c0_10 = arith.constant 0 : index
    %11 = vector.load %arg4[%c0_9, %c0_10] : memref<1x512xf32, #tpu.memory_space<vmem>>, vector<1x512xf32>
    %12 = vector.broadcast %11 : vector<1x512xf32> to vector<8x512xf32>
    %13 = arith.addf %10, %12 : vector<8x512xf32>
    %cst_11 = arith.constant 0.000000e+00 : f32
    %14 = vector.broadcast %cst_11 : f32 to vector<8x512xf32>
    %15 = arith.maximumf %13, %14 : vector<8x512xf32>
    %16 = arith.truncf %15 : vector<8x512xf32> to vector<8x512xbf16>
    %c0_12 = arith.constant 0 : index
    %c0_13 = arith.constant 0 : index
    %17 = vector.load %arg5[%c0_12, %c0_13] : memref<512x128xbf16, #tpu.memory_space<vmem>>, vector<512x128xbf16>
    %cst_14 = arith.constant dense<0.000000e+00> : vector<8x128xf32>
    %18 = tpu.matmul %16, %17, %cst_14 {dimension_numbers = #tpu.dot_dimension_numbers<[1], [0], [0], [1], [0, 0, 1, 1], [], []>} : vector<8x512xbf16>, vector<512x128xbf16>, vector<8x128xf32> -> vector<8x128xf32>
    %c0_15 = arith.constant 0 : index
    %c0_16 = arith.constant 0 : index
    %19 = vector.load %arg6[%c0_15, %c0_16] : memref<1x128xf32, #tpu.memory_space<vmem>>, vector<1x128xf32>
    %20 = vector.broadcast %19 : vector<1x128xf32> to vector<8x128xf32>
    %21 = arith.addf %18, %20 : vector<8x128xf32>
    %22 = tpu.iota {dimensions = array<i32: 0>} : vector<8x1xi32>
    %c8_i32 = arith.constant 8 : i32
    %23 = vector.broadcast %c8_i32 : i32 to vector<8x1xi32>
    %24 = arith.cmpi slt, %22, %23 : vector<8x1xi32>
    %cst_17 = arith.constant 0.000000e+00 : f32
    %25 = vector.shape_cast %24 : vector<8x1xi1> to vector<8x1xi1>
    %26 = vector.broadcast %25 : vector<8x1xi1> to vector<8x128xi1>
    %27 = vector.broadcast %cst_17 : f32 to vector<8x128xf32>
    %28 = arith.select %26, %21, %27 : vector<8x128xi1>, vector<8x128xf32>
    %cst_18 = arith.constant dense<0.000000e+00> : vector<128xf32>
    %29 = vector.multi_reduction <add>, %28, %cst_18 [0] : vector<8x128xf32> to vector<128xf32>
    %30 = vector.shape_cast %29 : vector<128xf32> to vector<1x128xf32>
    %cst_19 = arith.constant 1.250000e-01 : f32
    %31 = vector.broadcast %cst_19 : f32 to vector<1x128xf32>
    %32 = arith.mulf %30, %31 : vector<1x128xf32>
    %33 = vector.broadcast %32 : vector<1x128xf32> to vector<8x128xf32>
    %34 = arith.subf %21, %33 : vector<8x128xf32>
    %cst_20 = arith.constant 0.000000e+00 : f32
    %35 = vector.shape_cast %24 : vector<8x1xi1> to vector<8x1xi1>
    %36 = vector.broadcast %35 : vector<8x1xi1> to vector<8x128xi1>
    %37 = vector.broadcast %cst_20 : f32 to vector<8x128xf32>
    %38 = arith.select %36, %34, %37 : vector<8x128xi1>, vector<8x128xf32>
    %39 = arith.mulf %38, %38 : vector<8x128xf32>
    %cst_21 = arith.constant dense<0.000000e+00> : vector<128xf32>
    %40 = vector.multi_reduction <add>, %39, %cst_21 [0] : vector<8x128xf32> to vector<128xf32>
    %41 = vector.shape_cast %40 : vector<128xf32> to vector<1x128xf32>
    %cst_22 = arith.constant 1.250000e-01 : f32
    %42 = vector.broadcast %cst_22 : f32 to vector<1x128xf32>
    %43 = arith.mulf %41, %42 : vector<1x128xf32>
    %cst_23 = arith.constant 9.99999974E-6 : f32
    %44 = vector.broadcast %cst_23 : f32 to vector<1x128xf32>
    %45 = arith.addf %43, %44 : vector<1x128xf32>
    %46 = math.rsqrt %45 : vector<1x128xf32>
    %47 = vector.broadcast %32 : vector<1x128xf32> to vector<8x128xf32>
    %48 = arith.subf %21, %47 : vector<8x128xf32>
    %c0_24 = arith.constant 0 : index
    %c0_25 = arith.constant 0 : index
    %49 = vector.load %arg7[%c0_24, %c0_25] : memref<1x128xf32, #tpu.memory_space<vmem>>, vector<1x128xf32>
    %50 = arith.mulf %49, %46 : vector<1x128xf32>
    %51 = vector.broadcast %50 : vector<1x128xf32> to vector<8x128xf32>
    %52 = arith.mulf %48, %51 : vector<8x128xf32>
    %c0_26 = arith.constant 0 : index
    %c0_27 = arith.constant 0 : index
    %53 = vector.load %arg8[%c0_26, %c0_27] : memref<1x128xf32, #tpu.memory_space<vmem>>, vector<1x128xf32>
    %54 = vector.broadcast %53 : vector<1x128xf32> to vector<8x128xf32>
    %55 = arith.addf %52, %54 : vector<8x128xf32>
    %c0_28 = arith.constant 0 : index
    %c0_29 = arith.constant 0 : index
    %56 = vector.load %arg9[%c0_28, %c0_29] : memref<8x128xf32, #tpu.memory_space<vmem>>, vector<8x128xf32>
    tpu.vector_store %arg9[%c0_28, %c0_29], %55 {strides = array<i32>} : memref<8x128xf32, #tpu.memory_space<vmem>>, vector<8x128xf32>,
    return
  }
}

</mosaic_0001>

<llo_original>
// kernel: tpu_custom_call.1
$region0: #{tpu_custom_call.1}
  #allocation0 [shape = 'u32[]', space=smem, size = 0x4, offset = 0x4, fixed_abs, tag = 'smem constant byte address 0x4 - core index']
  #allocation1 [shape = 'u32[144,128]{1,0:T(1,128)}', space=vmem, size = 0x12000, scoped, tag = 'internal scratch']
  %s0 = inlined_call_operand.hbm [shape: bf16[8,128], index: 0, kind: input, shape index: {}]
  %s1 = inlined_call_operand.hbm [shape: bf16[128,512], index: 1, kind: input, shape index: {}]
  %s2 = inlined_call_operand.vmem [shape: f32[1,512], index: 2, kind: input, shape index: {}]
  %s3 = inlined_call_operand.hbm [shape: bf16[512,512], index: 3, kind: input, shape index: {}]
  %s4 = inlined_call_operand.vmem [shape: f32[1,512], index: 4, kind: input, shape index: {}]
  %s5 = inlined_call_operand.hbm [shape: bf16[512,128], index: 5, kind: input, shape index: {}]
  %s6 = inlined_call_operand.vmem [shape: f32[1,128], index: 6, kind: input, shape index: {}]
  %s7 = inlined_call_operand.vmem [shape: f32[1,128], index: 7, kind: input, shape index: {}]
  %s8 = inlined_call_operand.vmem [shape: f32[1,128], index: 8, kind: input, shape index: {}]
  %s9 = inlined_call_operand.hbm [shape: f32[8,128], index: 9, kind: output, shape index: {}]
  %s10 = sld [smem:[#allocation0]]
  $region62: #{tpu_custom_call.1} parent=0
    _
  %s12 = ssub.s32 1, %s10
  %s13 = scalar_select 0, %s12, %s10
  $region1: #{tpu_custom_call.1} parent=0
    #allocation2 [shape = 'u8[2048]{0}', space=vmem, size = 0x800, scoped, tag = 'input window, operand 0, single buffered']
    #allocation3 [shape = 's32[1]{0}', space=sflag, size = 0x4, scoped, tag = 'scoped memory for tpu_custom_call.1']
    #allocation4 [shape = 's32[1]{0}', space=sflag, size = 0x4, scoped, tag = 'scoped memory for tpu_custom_call.1']
    #allocation5 [shape = 'u8[131072]{0}', space=vmem, size = 0x20000, scoped, tag = 'input window, operand 1, single buffered']
    #allocation6 [shape = 's32[1]{0}', space=sflag, size = 0x4, scoped, tag = 'scoped memory for tpu_custom_call.1']
    #allocation7 [shape = 'u8[524288]{0}', space=vmem, size = 0x80000, scoped, tag = 'input window, operand 3, single buffered']
    #allocation8 [shape = 'u8[131072]{0}', space=vmem, size = 0x20000, scoped, tag = 'input window, operand 5, single buffered']
    #allocation9 [shape = 's32[1]{0}', space=sflag, size = 0x4, scoped, tag = 'scoped memory for tpu_custom_call.1']
    #allocation10 [shape = 'u8[4096]{0}', space=vmem, size = 0x1000, scoped, tag = 'output window, operand 0, single buffered']
    %14 = vsyncpa [#allocation3], 0
    %15 = vsyncpa [#allocation6], 0
    %16 = vsyncpa [#allocation9], 0
    %17 = vsyncpa [#allocation4], 0
    // Predicated region
    $region2: #{tpu_custom_call.1} parent=1 // pred_check
      _
    $region3: #{tpu_custom_call.1} parent=1 // pred_check_branch
      %19 = sbr.rel (0) target = $region5
    $region4: #{tpu_custom_call.1} parent=1 // pred_region
      %s21 = ssub.s32 64, 64
      %22 = vsyncadd [#allocation3], %s21
      %s24 = sshll.u32 [#allocation2], 4
      %s25 = int_to_ptr.vmem [resolvable:$true] %s24
      %27 = dma.hbm_to_vmem [thread:$0]  %s0, 64, %s25, [#allocation3]
    $region5: #{tpu_custom_call.1} parent=1 // pred_fallthru
      _
    // Predicated region
    $region6: #{tpu_custom_call.1} parent=1 // pred_check
      _
    $region7: #{tpu_custom_call.1} parent=1 // pred_check_branch
      %29 = sbr.rel (0) target = $region9
    $region8: #{tpu_custom_call.1} parent=1 // pred_region
      %s31 = ssub.s32 4096, 4096
      %32 = vsyncadd [#allocation6], %s31
      %s33 = sshll.u32 [#allocation5], 4
      %s34 = int_to_ptr.vmem [resolvable:$true] %s33
      %39 = dma.hbm_to_vmem [thread:$0]  %s1, 4096, %s34, [#allocation6], 256, 256, 16
    $region9: #{tpu_custom_call.1} parent=1 // pred_fallthru
      _
    // Predicated region
    $region10: #{tpu_custom_call.1} parent=1 // pred_check
      _
    $region11: #{tpu_custom_call.1} parent=1 // pred_check_branch
      %41 = sbr.rel (0) target = $region13
    $region12: #{tpu_custom_call.1} parent=1 // pred_region
      _
    $region13: #{tpu_custom_call.1} parent=1 // pred_fallthru
      _
    // Predicated region
    $region14: #{tpu_custom_call.1} parent=1 // pred_check
      _
    $region15: #{tpu_custom_call.1} parent=1 // pred_check_branch
      %43 = sbr.rel (0) target = $region17
    $region16: #{tpu_custom_call.1} parent=1 // pred_region
      %s45 = ssub.s32 16384, 16384
      %46 = vsyncadd [#allocation6], %s45
      %s47 = sshll.u32 [#allocation7], 4
      %s48 = int_to_ptr.vmem [resolvable:$true] %s47
      %53 = dma.hbm_to_vmem [thread:$0]  %s3, 16384, %s48, [#allocation6], 256, 256, 16
    $region17: #{tpu_custom_call.1} parent=1 // pred_fallthru
      _
    // Predicated region
    $region18: #{tpu_custom_call.1} parent=1 // pred_check
      _
    $region19: #{tpu_custom_call.1} parent=1 // pred_check_branch
      %55 = sbr.rel (0) target = $region21
    $region20: #{tpu_custom_call.1} parent=1 // pred_region
      _
    $region21: #{tpu_custom_call.1} parent=1 // pred_fallthru
      _
    // Predicated region
    $region22: #{tpu_custom_call.1} parent=1 // pred_check
      _
    $region23: #{tpu_custom_call.1} parent=1 // pred_check_branch
      %57 = sbr.rel (0) target = $region25
    $region24: #{tpu_custom_call.1} parent=1 // pred_region
      %s59 = ssub.s32 4096, 4096
      %60 = vsyncadd [#allocation9], %s59
      %s61 = sshll.u32 [#allocation8], 4
      %s62 = int_to_ptr.vmem [resolvable:$true] %s61
      %67 = dma.hbm_to_vmem [thread:$0]  %s5, 4096, %s62, [#allocation9], 64, 64, 4
    $region25: #{tpu_custom_call.1} parent=1 // pred_fallthru
      _
    // Predicated region
    $region26: #{tpu_custom_call.1} parent=1 // pred_check
      _
    $region27: #{tpu_custom_call.1} parent=1 // pred_check_branch
      %69 = sbr.rel (0) target = $region29
    $region28: #{tpu_custom_call.1} parent=1 // pred_region
      _
    $region29: #{tpu_custom_call.1} parent=1 // pred_fallthru
      _
    // Predicated region
    $region30: #{tpu_custom_call.1} parent=1 // pred_check
      _
    $region31: #{tpu_custom_call.1} parent=1 // pred_check_branch
      %71 = sbr.rel (0) target = $region33
    $region32: #{tpu_custom_call.1} parent=1 // pred_region
      _
    $region33: #{tpu_custom_call.1} parent=1 // pred_fallthru
      _
    // Predicated region
    $region34: #{tpu_custom_call.1} parent=1 // pred_check
      _
    $region35: #{tpu_custom_call.1} parent=1 // pred_check_branch
      %73 = sbr.rel (0) target = $region37
    $region36: #{tpu_custom_call.1} parent=1 // pred_region
      _
    $region37: #{tpu_custom_call.1} parent=1 // pred_fallthru
      _
    // Predicated region
    $region38: #{tpu_custom_call.1} parent=1 // pred_check
      _
    $region39: #{tpu_custom_call.1} parent=1 // pred_check_branch
      %75 = sbr.rel (0) target = $region41
    $region40: #{tpu_custom_call.1} parent=1 // pred_region
      %76 = dma.done [#allocation3], 64
    $region41: #{tpu_custom_call.1} parent=1 // pred_fallthru
      _
    // Predicated region
    $region42: #{tpu_custom_call.1} parent=1 // pred_check
      _
    $region43: #{tpu_custom_call.1} parent=1 // pred_check_branch
      %78 = sbr.rel (0) target = $region45
    $region44: #{tpu_custom_call.1} parent=1 // pred_region
      %79 = dma.done [#allocation6], 4096
    $region45: #{tpu_custom_call.1} parent=1 // pred_fallthru
      _
    // Predicated region
    $region46: #{tpu_custom_call.1} parent=1 // pred_check
      _
    $region47: #{tpu_custom_call.1} parent=1 // pred_check_branch
      %81 = sbr.rel (0) target = $region49
    $region48: #{tpu_custom_call.1} parent=1 // pred_region
      %82 = dma.done [#allocation6], 16384
    $region49: #{tpu_custom_call.1} parent=1 // pred_fallthru
      _
    // Predicated region
    $region50: #{tpu_custom_call.1} parent=1 // pred_check
      _
    $region51: #{tpu_custom_call.1} parent=1 // pred_check_branch
      %84 = sbr.rel (0) target = $region53
    $region52: #{tpu_custom_call.1} parent=1 // pred_region
      %85 = dma.done [#allocation9], 4096
    $region53: #{tpu_custom_call.1} parent=1 // pred_fallthru
      _
    %v87 = vld [vmem:[#allocation2] sm:$0xf]
    %v88 = vld [vmem:[#allocation5] sm:$0xff]
    %v89 = vld [vmem:[#allocation5 + $0x8] sm:$0xff]
    %v90 = vld [vmem:[#allocation5 + $0x10] sm:$0xff]
    %v91 = vld [vmem:[#allocation5 + $0x18] sm:$0xff]
    %v92 = vld [vmem:[#allocation5 + $0x20] sm:$0xff]
    %v93 = vld [vmem:[#allocation5 + $0x28] sm:$0xff]
    %v94 = vld [vmem:[#allocation5 + $0x30] sm:$0xff]
    %v95 = vld [vmem:[#allocation5 + $0x38] sm:$0xff]
    %v96 = vld [vmem:[#allocation5 + $0x40] sm:$0xff]
    %v97 = vld [vmem:[#allocation5 + $0x48] sm:$0xff]
    %v98 = vld [vmem:[#allocation5 + $0x50] sm:$0xff]
    %v99 = vld [vmem:[#allocation5 + $0x58] sm:$0xff]
    %v100 = vld [vmem:[#allocation5 + $0x60] sm:$0xff]
    %v101 = vld [vmem:[#allocation5 + $0x68] sm:$0xff]
    %v102 = vld [vmem:[#allocation5 + $0x70] sm:$0xff]
    %v103 = vld [vmem:[#allocation5 + $0x78] sm:$0xff]
    %v104 = vld [vmem:[#allocation5 + $0x80] sm:$0xff]
    %v105 = vld [vmem:[#allocation5 + $0x88] sm:$0xff]
    %v106 = vld [vmem:[#allocation5 + $0x90] sm:$0xff]
    %v107 = vld [vmem:[#allocation5 + $0x98] sm:$0xff]
    %v108 = vld [vmem:[#allocation5 + $0xa0] sm:$0xff]
    %v109 = vld [vmem:[#allocation5 + $0xa8] sm:$0xff]
    %v110 = vld [vmem:[#allocation5 + $0xb0] sm:$0xff]
    %v111 = vld [vmem:[#allocation5 + $0xb8] sm:$0xff]
    %v112 = vld [vmem:[#allocation5 + $0xc0] sm:$0xff]
    %v113 = vld [vmem:[#allocation5 + $0xc8] sm:$0xff]
    %v114 = vld [vmem:[#allocation5 + $0xd0] sm:$0xff]
    %v115 = vld [vmem:[#allocation5 + $0xd8] sm:$0xff]
    %v116 = vld [vmem:[#allocation5 + $0xe0] sm:$0xff]
    %v117 = vld [vmem:[#allocation5 + $0xe8] sm:$0xff]
    %v118 = vld [vmem:[#allocation5 + $0xf0] sm:$0xff]
    %v119 = vld [vmem:[#allocation5 + $0xf8] sm:$0xff]
    %v120 = vld [vmem:[%s2] sm:$0xf]
    %v122 = vlaneseq
    %v123 = vshrl.u32 %v122, 7
    %v124 = vsub.s32 0, %v123
    %v125 = vrot.slane %v120, %v124
    %v126 = vlaneseq
    %v127 = vshrl.u32 %v126, 7
    %v128 = vsub.s32 1, %v127
    %v129 = vrot.slane %v120, %v128
    %v130 = vlaneseq
    %v131 = vshrl.u32 %v130, 7
    %v132 = vsub.s32 2, %v131
    %v133 = vrot.slane %v120, %v132
    %v134 = vlaneseq
    %v135 = vshrl.u32 %v134, 7
    %v136 = vsub.s32 3, %v135
    %v137 = vrot.slane %v120, %v136
    %v174 = vunpack.c.l.b16 %v88
    %v175 = vunpack.c.h.b16 %v88
    %v176 = vunpack.c.l.b16 %v89
    %v177 = vunpack.c.h.b16 %v89
    %v178 = vunpack.c.l.b16 %v90
    %v179 = vunpack.c.h.b16 %v90
    %v180 = vunpack.c.l.b16 %v91
    %v181 = vunpack.c.h.b16 %v91
    %v182 = vunpack.c.l.b16 %v92
    %v183 = vunpack.c.h.b16 %v92
    %v184 = vunpack.c.l.b16 %v93
    %v185 = vunpack.c.h.b16 %v93
    %v186 = vunpack.c.l.b16 %v94
    %v187 = vunpack.c.h.b16 %v94
    %v188 = vunpack.c.l.b16 %v95
    %v189 = vunpack.c.h.b16 %v95
    %v190 = vunpack.c.l.b16 %v96
    %v191 = vunpack.c.h.b16 %v96
    %v192 = vunpack.c.l.b16 %v97
    %v193 = vunpack.c.h.b16 %v97
    %v194 = vunpack.c.l.b16 %v98
    %v195 = vunpack.c.h.b16 %v98
    %v196 = vunpack.c.l.b16 %v99
    %v197 = vunpack.c.h.b16 %v99
    %v198 = vunpack.c.l.b16 %v100
    %v199 = vunpack.c.h.b16 %v100
    %v200 = vunpack.c.l.b16 %v101
    %v201 = vunpack.c.h.b16 %v101
    %v202 = vunpack.c.l.b16 %v102
    %v203 = vunpack.c.h.b16 %v102
    %v204 = vunpack.c.l.b16 %v103
    %v205 = vunpack.c.h.b16 %v103
    %v206 = vunpack.c.l.b16 %v104
    %v207 = vunpack.c.h.b16 %v104
    %v208 = vunpack.c.l.b16 %v105
    %v209 = vunpack.c.h.b16 %v105
    %v210 = vunpack.c.l.b16 %v106
    %v211 = vunpack.c.h.b16 %v106
    %v212 = vunpack.c.l.b16 %v107
    %v213 = vunpack.c.h.b16 %v107
    %v214 = vunpack.c.l.b16 %v108
    %v215 = vunpack.c.h.b16 %v108
    %v216 = vunpack.c.l.b16 %v109
    %v217 = vunpack.c.h.b16 %v109
    %v218 = vunpack.c.l.b16 %v110
    %v219 = vunpack.c.h.b16 %v110
    %v220 = vunpack.c.l.b16 %v111
    %v221 = vunpack.c.h.b16 %v111
    %v222 = vunpack.c.l.b16 %v112
    %v223 = vunpack.c.h.b16 %v112
    %v224 = vunpack.c.l.b16 %v113
    %v225 = vunpack.c.h.b16 %v113
    %v226 = vunpack.c.l.b16 %v114
    %v227 = vunpack.c.h.b16 %v114
    %v228 = vunpack.c.l.b16 %v115
    %v229 = vunpack.c.h.b16 %v115
    %v230 = vunpack.c.l.b16 %v116
    %v231 = vunpack.c.h.b16 %v116
    %v232 = vunpack.c.l.b16 %v117
    %v233 = vunpack.c.h.b16 %v117
    %v234 = vunpack.c.l.b16 %v118
    %v235 = vunpack.c.h.b16 %v118
    %v236 = vunpack.c.l.b16 %v119
    %v237 = vunpack.c.h.b16 %v119
    %v238 = vpack.c.b16 %v178, %v174
    %v239 = vpack.c.b16 %v179, %v175
    %v240 = vpack.c.b16 %v180, %v176
    %v241 = vpack.c.b16 %v181, %v177
    %v242 = vpack.c.b16 %v186, %v182
    %v243 = vpack.c.b16 %v187, %v183
    %v244 = vpack.c.b16 %v188, %v184
    %v245 = vpack.c.b16 %v189, %v185
    %v246 = vpack.c.b16 %v194, %v190
    %v247 = vpack.c.b16 %v195, %v191
    %v248 = vpack.c.b16 %v196, %v192
    %v249 = vpack.c.b16 %v197, %v193
    %v250 = vpack.c.b16 %v202, %v198
    %v251 = vpack.c.b16 %v203, %v199
    %v252 = vpack.c.b16 %v204, %v200
    %v253 = vpack.c.b16 %v205, %v201
    %v254 = vpack.c.b16 %v210, %v206
    %v255 = vpack.c.b16 %v211, %v207
    %v256 = vpack.c.b16 %v212, %v208
    %v257 = vpack.c.b16 %v213, %v209
    %v258 = vpack.c.b16 %v218, %v214
    %v259 = vpack.c.b16 %v219, %v215
    %v260 = vpack.c.b16 %v220, %v216
    %v261 = vpack.c.b16 %v221, %v217
    %v262 = vpack.c.b16 %v226, %v222
    %v263 = vpack.c.b16 %v227, %v223
    %v264 = vpack.c.b16 %v228, %v224
    %v265 = vpack.c.b16 %v229, %v225
    %v266 = vpack.c.b16 %v234, %v230
    %v267 = vpack.c.b16 %v235, %v231
    %v268 = vpack.c.b16 %v236, %v232
    %v269 = vpack.c.b16 %v237, %v233
    %302 = vmatprep.subr.bf16.mxu0 %v239
    %303 = vmatpush1.bf16.msra.mxu0 %v238
    %304 = vmatprep.subr.bf16.mxu0 %v243
    %305 = vmatpush1.bf16.msra.mxu0 %v242
    %306 = vmatprep.subr.bf16.mxu0 %v247
    %307 = vmatpush1.bf16.msra.mxu0 %v246
    %308 = vmatprep.subr.bf16.mxu0 %v251
    %309 = vmatpush1.bf16.msra.mxu0 %v250
    %310 = vmatprep.subr.bf16.mxu0 %v255
    %311 = vmatpush1.bf16.msra.mxu0 %v254
    %312 = vmatprep.subr.bf16.mxu0 %v259
    %313 = vmatpush1.bf16.msra.mxu0 %v258
    %314 = vmatprep.subr.bf16.mxu0 %v263
    %315 = vmatpush1.bf16.msra.mxu0 %v262
    %316 = vmatprep.subr.bf16.mxu0 %v267
    %317 = vmatpush1.bf16.msra.mxu0 %v266
    %318 = vmatprep.subr.bf16.mxu0 0
    %319 = vmatpush1.bf16.msra.mxu0 0
    %320 = vmatprep.subr.bf16.mxu0 0
    %321 = vmatpush1.bf16.msra.mxu0 0
    %322 = vmatprep.subr.bf16.mxu0 0
    %323 = vmatpush1.bf16.msra.mxu0 0
    %324 = vmatprep.subr.bf16.mxu0 0
    %325 = vmatpush1.bf16.msra.mxu0 0
    %326 = vmatprep.subr.bf16.mxu0 0
    %327 = vmatpush1.bf16.msra.mxu0 0
    %328 = vmatprep.subr.bf16.mxu0 0
    %329 = vmatpush1.bf16.msra.mxu0 0
    %330 = vmatprep.subr.bf16.mxu0 0
    %331 = vmatpush1.bf16.msra.mxu0 0
    %332 = vmatprep.subr.bf16.mxu0 0
    %333 = vmatpush1.bf16.msra.mxu0 0
    %334 = vmatprep.mubr.bf16.mxu0 0
    %335 = vmatmul.mubr.bf16.gmra.mrb[0].mxu0 %v87
    %v336 = vpop.f32.mrb[0].mxu0
    %v337 = vadd.f32 %v125, %v336
    %v338 = vpop.f32.mrb[0].mxu0
    %v339 = vadd.f32 %v129, %v338
    %v340 = vpop.f32.mrb[0].mxu0
    %v341 = vpop.f32.mrb[0].mxu0
    %342 = vdwg.mxu0
    %343 = vmatprep.subr.bf16.mxu0 %v241
    %344 = vmatpush1.bf16.msra.mxu0 %v240
    %345 = vmatprep.subr.bf16.mxu0 %v245
    %346 = vmatpush1.bf16.msra.mxu0 %v244
    %347 = vmatprep.subr.bf16.mxu0 %v249
    %348 = vmatpush1.bf16.msra.mxu0 %v248
    %349 = vmatprep.subr.bf16.mxu0 %v253
    %350 = vmatpush1.bf16.msra.mxu0 %v252
    %351 = vmatprep.subr.bf16.mxu0 %v257
    %352 = vmatpush1.bf16.msra.mxu0 %v256
    %353 = vmatprep.subr.bf16.mxu0 %v261
    %354 = vmatpush1.bf16.msra.mxu0 %v260
    %355 = vmatprep.subr.bf16.mxu0 %v265
    %356 = vmatpush1.bf16.msra.mxu0 %v264
    %357 = vmatprep.subr.bf16.mxu0 %v269
    %358 = vmatpush1.bf16.msra.mxu0 %v268
    %359 = vmatprep.subr.bf16.mxu0 0
    %360 = vmatpush1.bf16.msra.mxu0 0
    %361 = vmatprep.subr.bf16.mxu0 0
    %362 = vmatpush1.bf16.msra.mxu0 0
    %363 = vmatprep.subr.bf16.mxu0 0
    %364 = vmatpush1.bf16.msra.mxu0 0
    %365 = vmatprep.subr.bf16.mxu0 0
    %366 = vmatpush1.bf16.msra.mxu0 0
    %367 = vmatprep.subr.bf16.mxu0 0
    %368 = vmatpush1.bf16.msra.mxu0 0
    %369 = vmatprep.subr.bf16.mxu0 0
    %370 = vmatpush1.bf16.msra.mxu0 0
    %371 = vmatprep.subr.bf16.mxu0 0
    %372 = vmatpush1.bf16.msra.mxu0 0
    %373 = vmatprep.subr.bf16.mxu0 0
    %374 = vmatpush1.bf16.msra.mxu0 0
    %375 = vmatprep.mubr.bf16.mxu0 0
    %376 = vmatmul.mubr.bf16.gmra.mrb[0].mxu0 %v87
    %v377 = vpop.f32.mrb[0].mxu0
    %v378 = vadd.f32 %v133, %v377
    %v379 = vpop.f32.mrb[0].mxu0
    %v380 = vadd.f32 %v137, %v379
    %v381 = vpop.f32.mrb[0].mxu0
    %v382 = vpop.f32.mrb[0].mxu0
    %383 = vdwg.mxu0
    %v384 = vmax.f32 %v337, 0.0
    %v385 = vmax.f32 %v339, 0.0
    %v386 = vmax.f32 %v378, 0.0
    %v387 = vmax.f32 %v380, 0.0
    %v388 = vpack.c.bf16 %v384, %v384
    %v389 = vpack.c.bf16 %v385, %v385
    %v390 = vpack.c.bf16 %v386, %v386
    %v391 = vpack.c.bf16 %v387, %v387
    %v392 = vld [vmem:[#allocation7] sm:$0xff]
    %v393 = vld [vmem:[#allocation7 + $0x8] sm:$0xff]
    %v394 = vld [vmem:[#allocation7 + $0x10] sm:$0xff]
    %v395 = vld [vmem:[#allocation7 + $0x18] sm:$0xff]
    %v396 = vld [vmem:[#allocation7 + $0x20] sm:$0xff]
    %v397 = vld [vmem:[#allocation7 + $0x28] sm:$0xff]
    %v398 = vld [vmem:[#allocation7 + $0x30] sm:$0xff]
    %v399 = vld [vmem:[#allocation7 + $0x38] sm:$0xff]
    %v400 = vld [vmem:[#allocation7 + $0x40] sm:$0xff]
    %v401 = vld [vmem:[#allocation7 + $0x48] sm:$0xff]
    %v402 = vld [vmem:[#allocation7 + $0x50] sm:$0xff]
    %v403 = vld [vmem:[#allocation7 + $0x58] sm:$0xff]
    %v404 = vld [vmem:[#allocation7 + $0x60] sm:$0xff]
    %v405 = vld [vmem:[#allocation7 + $0x68] sm:$0xff]
    %v406 = vld [vmem:[#allocation7 + $0x70] sm:$0xff]
    %v407 = vld [vmem:[#allocation7 + $0x78] sm:$0xff]
    %v408 = vld [vmem:[#allocation7 + $0x80] sm:$0xff]
    %v409 = vld [vmem:[#allocation7 + $0x88] sm:$0xff]
    %v410 = vld [vmem:[#allocation7 + $0x90] sm:$0xff]
    %v411 = vld [vmem:[#allocation7 + $0x98] sm:$0xff]
    %v412 = vld [vmem:[#allocation7 + $0xa0] sm:$0xff]
    %v413 = vld [vmem:[#allocation7 + $0xa8] sm:$0xff]
    %v414 = vld [vmem:[#allocation7 + $0xb0] sm:$0xff]
    %v415 = vld [vmem:[#allocation7 + $0xb8] sm:$0xff]
    %v416 = vld [vmem:[#allocation7 + $0xc0] sm:$0xff]
    %v417 = vld [vmem:[#allocation7 + $0xc8] sm:$0xff]
    %v418 = vld [vmem:[#allocation7 + $0xd0] sm:$0xff]
    %v419 = vld [vmem:[#allocation7 + $0xd8] sm:$0xff]
    %v420 = vld [vmem:[#allocation7 + $0xe0] sm:$0xff]
    %v421 = vld [vmem:[#allocation7 + $0xe8] sm:$0xff]
    %v422 = vld [vmem:[#allocation7 + $0xf0] sm:$0xff]
    %v423 = vld [vmem:[#allocation7 + $0xf8] sm:$0xff]
    %v424 = vld [vmem:[#allocation7 + $0x100] sm:$0xff]
    %v425 = vld [vmem:[#allocation7 + $0x108] sm:$0xff]
    %v426 = vld [vmem:[#allocation7 + $0x110] sm:$0xff]
    %v427 = vld [vmem:[#allocation7 + $0x118] sm:$0xff]
    %v428 = vld [vmem:[#allocation7 + $0x120] sm:$0xff]
    %v429 = vld [vmem:[#allocation7 + $0x128] sm:$0xff]
    %v430 = vld [vmem:[#allocation7 + $0x130] sm:$0xff]
    %v431 = vld [vmem:[#allocation7 + $0x138] sm:$0xff]
    %v432 = vld [vmem:[#allocation7 + $0x140] sm:$0xff]
    %v433 = vld [vmem:[#allocation7 + $0x148] sm:$0xff]
    %v434 = vld [vmem:[#allocation7 + $0x150] sm:$0xff]
    %v435 = vld [vmem:[#allocation7 + $0x158] sm:$0xff]
    %v436 = vld [vmem:[#allocation7 + $0x160] sm:$0xff]
    %v437 = vld [vmem:[#allocation7 + $0x168] sm:$0xff]
    %v438 = vld [vmem:[#allocation7 + $0x170] sm:$0xff]
    %v439 = vld [vmem:[#allocation7 + $0x178] sm:$0xff]
    %v440 = vld [vmem:[#allocation7 + $0x180] sm:$0xff]
    %v441 = vld [vmem:[#allocation7 + $0x188] sm:$0xff]
    %v442 = vld [vmem:[#allocation7 + $0x190] sm:$0xff]
    %v443 = vld [vmem:[#allocation7 + $0x198] sm:$0xff]
    %v444 = vld [vmem:[#allocation7 + $0x1a0] sm:$0xff]
    %v445 = vld [vmem:[#allocation7 + $0x1a8] sm:$0xff]
    %v446 = vld [vmem:[#allocation7 + $0x1b0] sm:$0xff]
    %v447 = vld [vmem:[#allocation7 + $0x1b8] sm:$0xff]
    %v448 = vld [vmem:[#allocation7 + $0x1c0] sm:$0xff]
    %v449 = vld [vmem:[#allocation7 + $0x1c8] sm:$0xff]
    %v450 = vld [vmem:[#allocation7 + $0x1d0] sm:$0xff]
    %v451 = vld [vmem:[#allocation7 + $0x1d8] sm:$0xff]
    %v452 = vld [vmem:[#allocation7 + $0x1e0] sm:$0xff]
    %v453 = vld [vmem:[#allocation7 + $0x1e8] sm:$0xff]
    %v454 = vld [vmem:[#allocation7 + $0x1f0] sm:$0xff]
    %v455 = vld [vmem:[#allocation7 + $0x1f8] sm:$0xff]
    %v456 = vld [vmem:[#allocation7 + $0x200] sm:$0xff]
    %v457 = vld [vmem:[#allocation7 + $0x208] sm:$0xff]
    %v458 = vld [vmem:[#allocation7 + $0x210] sm:$0xff]
    %v459 = vld [vmem:[#allocation7 + $0x218] sm:$0xff]
    %v460 = vld [vmem:[#allocation7 + $0x220] sm:$0xff]
    %v461 = vld [vmem:[#allocation7 + $0x228] sm:$0xff]
    %v462 = vld [vmem:[#allocation7 + $0x230] sm:$0xff]
    %v463 = vld [vmem:[#allocation7 + $0x238] sm:$0xff]
    %v464 = vld [vmem:[#allocation7 + $0x240] sm:$0xff]
    %v465 = vld [vmem:[#allocation7 + $0x248] sm:$0xff]
    %v466 = vld [vmem:[#allocation7 + $0x250] sm:$0xff]
    %v467 = vld [vmem:[#allocation7 + $0x258] sm:$0xff]
    %v468 = vld [vmem:[#allocation7 + $0x260] sm:$0xff]
    %v469 = vld [vmem:[#allocation7 + $0x268] sm:$0xff]
    %v470 = vld [vmem:[#allocation7 + $0x270] sm:$0xff]
    %v471 = vld [vmem:[#allocation7 + $0x278] sm:$0xff]
    %v472 = vld [vmem:[#allocation7 + $0x280] sm:$0xff]
    %v473 = vld [vmem:[#allocation7 + $0x288] sm:$0xff]
    %v474 = vld [vmem:[#allocation7 + $0x290] sm:$0xff]
    %v475 = vld [vmem:[#allocation7 + $0x298] sm:$0xff]
    %v476 = vld [vmem:[#allocation7 + $0x2a0] sm:$0xff]
    %v477 = vld [vmem:[#allocation7 + $0x2a8] sm:$0xff]
    %v478 = vld [vmem:[#allocation7 + $0x2b0] sm:$0xff]
    %v479 = vld [vmem:[#allocation7 + $0x2b8] sm:$0xff]
    %v480 = vld [vmem:[#allocation7 + $0x2c0] sm:$0xff]
    %v481 = vld [vmem:[#allocation7 + $0x2c8] sm:$0xff]
    %v482 = vld [vmem:[#allocation7 + $0x2d0] sm:$0xff]
    %v483 = vld [vmem:[#allocation7 + $0x2d8] sm:$0xff]
    %v484 = vld [vmem:[#allocation7 + $0x2e0] sm:$0xff]
    %v485 = vld [vmem:[#allocation7 + $0x2e8] sm:$0xff]
    %v486 = vld [vmem:[#allocation7 + $0x2f0] sm:$0xff]
    %v487 = vld [vmem:[#allocation7 + $0x2f8] sm:$0xff]
    %v488 = vld [vmem:[#allocation7 + $0x300] sm:$0xff]
    %v489 = vld [vmem:[#allocation7 + $0x308] sm:$0xff]
    %v490 = vld [vmem:[#allocation7 + $0x310] sm:$0xff]
    %v491 = vld [vmem:[#allocation7 + $0x318] sm:$0xff]
    %v492 = vld [vmem:[#allocation7 + $0x320] sm:$0xff]
    %v493 = vld [vmem:[#allocation7 + $0x328] sm:$0xff]
    %v494 = vld [vmem:[#allocation7 + $0x330] sm:$0xff]
    %v495 = vld [vmem:[#allocation7 + $0x338] sm:$0xff]
    %v496 = vld [vmem:[#allocation7 + $0x340] sm:$0xff]
    %v497 = vld [vmem:[#allocation7 + $0x348] sm:$0xff]
    %v498 = vld [vmem:[#allocation7 + $0x350] sm:$0xff]
    %v499 = vld [vmem:[#allocation7 + $0x358] sm:$0xff]
    %v500 = vld [vmem:[#allocation7 + $0x360] sm:$0xff]
    %v501 = vld [vmem:[#allocation7 + $0x368] sm:$0xff]
    %v502 = vld [vmem:[#allocation7 + $0x370] sm:$0xff]
    %v503 = vld [vmem:[#allocation7 + $0x378] sm:$0xff]
    %v504 = vld [vmem:[#allocation7 + $0x380] sm:$0xff]
    %v505 = vld [vmem:[#allocation7 + $0x388] sm:$0xff]
    %v506 = vld [vmem:[#allocation7 + $0x390] sm:$0xff]
    %v507 = vld [vmem:[#allocation7 + $0x398] sm:$0xff]
    %v508 = vld [vmem:[#allocation7 + $0x3a0] sm:$0xff]
    %v509 = vld [vmem:[#allocation7 + $0x3a8] sm:$0xff]
    %v510 = vld [vmem:[#allocation7 + $0x3b0] sm:$0xff]
    %v511 = vld [vmem:[#allocation7 + $0x3b8] sm:$0xff]
    %v512 = vld [vmem:[#allocation7 + $0x3c0] sm:$0xff]
    %v513 = vld [vmem:[#allocation7 + $0x3c8] sm:$0xff]
    %v514 = vld [vmem:[#allocation7 + $0x3d0] sm:$0xff]
    %v515 = vld [vmem:[#allocation7 + $0x3d8] sm:$0xff]
    %v516 = vld [vmem:[#allocation7 + $0x3e0] sm:$0xff]
    %v517 = vld [vmem:[#allocation7 + $0x3e8] sm:$0xff]
    %v518 = vld [vmem:[#allocation7 + $0x3f0] sm:$0xff]
    %v519 = vld [vmem:[#allocation7 + $0x3f8] sm:$0xff]
    %v520 = vld [vmem:[%s4] sm:$0xf]
    %v522 = vlaneseq
    %v523 = vshrl.u32 %v522, 7
    %v524 = vsub.s32 0, %v523
    %v525 = vrot.slane %v520, %v524
    %v526 = vlaneseq
    %v527 = vshrl.u32 %v526, 7
    %v528 = vsub.s32 1, %v527
    %v529 = vrot.slane %v520, %v528
    %v530 = vlaneseq
    %v531 = vshrl.u32 %v530, 7
    %v532 = vsub.s32 2, %v531
    %v533 = vrot.slane %v520, %v532
    %v534 = vlaneseq
    %v535 = vshrl.u32 %v534, 7
    %v536 = vsub.s32 3, %v535
    %v537 = vrot.slane %v520, %v536
    %v670 = vunpack.c.l.b16 %v392
    %v671 = vunpack.c.h.b16 %v392
    %v672 = vunpack.c.l.b16 %v393
    %v673 = vunpack.c.h.b16 %v393
    %v674 = vunpack.c.l.b16 %v394
    %v675 = vunpack.c.h.b16 %v394
    %v676 = vunpack.c.l.b16 %v395
    %v677 = vunpack.c.h.b16 %v395
    %v678 = vunpack.c.l.b16 %v396
    %v679 = vunpack.c.h.b16 %v396
    %v680 = vunpack.c.l.b16 %v397
    %v681 = vunpack.c.h.b16 %v397
    %v682 = vunpack.c.l.b16 %v398
    %v683 = vunpack.c.h.b16 %v398
    %v684 = vunpack.c.l.b16 %v399
    %v685 = vunpack.c.h.b16 %v399
    %v686 = vunpack.c.l.b16 %v400
    %v687 = vunpack.c.h.b16 %v400
    %v688 = vunpack.c.l.b16 %v401
    %v689 = vunpack.c.h.b16 %v401
    %v690 = vunpack.c.l.b16 %v402
    %v691 = vunpack.c.h.b16 %v402
    %v692 = vunpack.c.l.b16 %v403
    %v693 = vunpack.c.h.b16 %v403
    %v694 = vunpack.c.l.b16 %v404
    %v695 = vunpack.c.h.b16 %v404
    %v696 = vunpack.c.l.b16 %v405
    %v697 = vunpack.c.h.b16 %v405
    %v698 = vunpack.c.l.b16 %v406
    %v699 = vunpack.c.h.b16 %v406
    %v700 = vunpack.c.l.b16 %v407
    %v701 = vunpack.c.h.b16 %v407
    %v702 = vunpack.c.l.b16 %v408
    %v703 = vunpack.c.h.b16 %v408
    %v704 = vunpack.c.l.b16 %v409
    %v705 = vunpack.c.h.b16 %v409
    %v706 = vunpack.c.l.b16 %v410
    %v707 = vunpack.c.h.b16 %v410
    %v708 = vunpack.c.l.b16 %v411
    %v709 = vunpack.c.h.b16 %v411
    %v710 = vunpack.c.l.b16 %v412
    %v711 = vunpack.c.h.b16 %v412
    %v712 = vunpack.c.l.b16 %v413
    %v713 = vunpack.c.h.b16 %v413
    %v714 = vunpack.c.l.b16 %v414
    %v715 = vunpack.c.h.b16 %v414
    %v716 = vunpack.c.l.b16 %v415
    %v717 = vunpack.c.h.b16 %v415
    %v718 = vunpack.c.l.b16 %v416
    %v719 = vunpack.c.h.b16 %v416
    %v720 = vunpack.c.l.b16 %v417
    %v721 = vunpack.c.h.b16 %v417
    %v722 = vunpack.c.l.b16 %v418
    %v723 = vunpack.c.h.b16 %v418
    %v724 = vunpack.c.l.b16 %v419
    %v725 = vunpack.c.h.b16 %v419
    %v726 = vunpack.c.l.b16 %v420
    %v727 = vunpack.c.h.b16 %v420
    %v728 = vunpack.c.l.b16 %v421
    %v729 = vunpack.c.h.b16 %v421
    %v730 = vunpack.c.l.b16 %v422
    %v731 = vunpack.c.h.b16 %v422
    %v732 = vunpack.c.l.b16 %v423
    %v733 = vunpack.c.h.b16 %v423
    %v734 = vunpack.c.l.b16 %v424
    %v735 = vunpack.c.h.b16 %v424
    %v736 = vunpack.c.l.b16 %v425
    %v737 = vunpack.c.h.b16 %v425
    %v738 = vunpack.c.l.b16 %v426
    %v739 = vunpack.c.h.b16 %v426
    %v740 = vunpack.c.l.b16 %v427
    %v741 = vunpack.c.h.b16 %v427
    %v742 = vunpack.c.l.b16 %v428
    %v743 = vunpack.c.h.b16 %v428
    %v744 = vunpack.c.l.b16 %v429
    %v745 = vunpack.c.h.b16 %v429
    %v746 = vunpack.c.l.b16 %v430
    %v747 = vunpack.c.h.b16 %v430
    %v748 = vunpack.c.l.b16 %v431
    %v749 = vunpack.c.h.b16 %v431
    %v750 = vunpack.c.l.b16 %v432
    %v751 = vunpack.c.h.b16 %v432
    %v752 = vunpack.c.l.b16 %v433
    %v753 = vunpack.c.h.b16 %v433
    %v754 = vunpack.c.l.b16 %v434
    %v755 = vunpack.c.h.b16 %v434
    %v756 = vunpack.c.l.b16 %v435
    %v757 = vunpack.c.h.b16 %v435
    %v758 = vunpack.c.l.b16 %v436
    %v759 = vunpack.c.h.b16 %v436
    %v760 = vunpack.c.l.b16 %v437
    %v761 = vunpack.c.h.b16 %v437
    %v762 = vunpack.c.l.b16 %v438
    %v763 = vunpack.c.h.b16 %v438
    %v764 = vunpack.c.l.b16 %v439
    %v765 = vunpack.c.h.b16 %v439
    %v766 = vunpack.c.l.b16 %v440
    %v767 = vunpack.c.h.b16 %v440
    %v768 = vunpack.c.l.b16 %v441
    %v769 = vunpack.c.h.b16 %v441
    %v770 = vunpack.c.l.b16 %v442
    %v771 = vunpack.c.h.b16 %v442
    %v772 = vunpack.c.l.b16 %v443
    %v773 = vunpack.c.h.b16 %v443
    %v774 = vunpack.c.l.b16 %v444
    %v775 = vunpack.c.h.b16 %v444
    %v776 = vunpack.c.l.b16 %v445
    %v777 = vunpack.c.h.b16 %v445
    %v778 = vunpack.c.l.b16 %v446
    %v779 = vunpack.c.h.b16 %v446
    %v780 = vunpack.c.l.b16 %v447
    %v781 = vunpack.c.h.b16 %v447
    %v782 = vunpack.c.l.b16 %v448
    %v783 = vunpack.c.h.b16 %v448
    %v784 = vunpack.c.l.b16 %v449
    %v785 = vunpack.c.h.b16 %v449
    %v786 = vunpack.c.l.b16 %v450
    %v787 = vunpack.c.h.b16 %v450
    %v788 = vunpack.c.l.b16 %v451
    %v789 = vunpack.c.h.b16 %v451
    %v790 = vunpack.c.l.b16 %v452
    %v791 = vunpack.c.h.b16 %v452
    %v792 = vunpack.c.l.b16 %v453
    %v793 = vunpack.c.h.b16 %v453
    %v794 = vunpack.c.l.b16 %v454
    %v795 = vunpack.c.h.b16 %v454
    %v796 = vunpack.c.l.b16 %v455
    %v797 = vunpack.c.h.b16 %v455
    %v798 = vunpack.c.l.b16 %v456
    %v799 = vunpack.c.h.b16 %v456
    %v800 = vunpack.c.l.b16 %v457
    %v801 = vunpack.c.h.b16 %v457
    %v802 = vunpack.c.l.b16 %v458
    %v803 = vunpack.c.h.b16 %v458
    %v804 = vunpack.c.l.b16 %v459
    %v805 = vunpack.c.h.b16 %v459
    %v806 = vunpack.c.l.b16 %v460
    %v807 = vunpack.c.h.b16 %v460
    %v808 = vunpack.c.l.b16 %v461
    %v809 = vunpack.c.h.b16 %v461
    %v810 = vunpack.c.l.b16 %v462
    %v811 = vunpack.c.h.b16 %v462
    %v812 = vunpack.c.l.b16 %v463
    %v813 = vunpack.c.h.b16 %v463
    %v814 = vunpack.c.l.b16 %v464
    %v815 = vunpack.c.h.b16 %v464
    %v816 = vunpack.c.l.b16 %v465
    %v817 = vunpack.c.h.b16 %v465
    %v818 = vunpack.c.l.b16 %v466
    %v819 = vunpack.c.h.b16 %v466
    %v820 = vunpack.c.l.b16 %v467
    %v821 = vunpack.c.h.b16 %v467
    %v822 = vunpack.c.l.b16 %v468
    %v823 = vunpack.c.h.b16 %v468
    %v824 = vunpack.c.l.b16 %v469
    %v825 = vunpack.c.h.b16 %v469
    %v826 = vunpack.c.l.b16 %v470
    %v827 = vunpack.c.h.b16 %v470
    %v828 = vunpack.c.l.b16 %v471
    %v829 = vunpack.c.h.b16 %v471
    %v830 = vunpack.c.l.b16 %v472
    %v831 = vunpack.c.h.b16 %v472
    %v832 = vunpack.c.l.b16 %v473
    %v833 = vunpack.c.h.b16 %v473
    %v834 = vunpack.c.l.b16 %v474
    %v835 = vunpack.c.h.b16 %v474
    %v836 = vunpack.c.l.b16 %v475
    %v837 = vunpack.c.h.b16 %v475
    %v838 = vunpack.c.l.b16 %v476
    %v839 = vunpack.c.h.b16 %v476
    %v840 = vunpack.c.l.b16 %v477
    %v841 = vunpack.c.h.b16 %v477
    %v842 = vunpack.c.l.b16 %v478
    %v843 = vunpack.c.h.b16 %v478
    %v844 = vunpack.c.l.b16 %v479
    %v845 = vunpack.c.h.b16 %v479
    %v846 = vunpack.c.l.b16 %v480
    %v847 = vunpack.c.h.b16 %v480
    %v848 = vunpack.c.l.b16 %v481
    %v849 = vunpack.c.h.b16 %v481
    %v850 = vunpack.c.l.b16 %v482
    %v851 = vunpack.c.h.b16 %v482
    %v852 = vunpack.c.l.b16 %v483
    %v853 = vunpack.c.h.b16 %v483
    %v854 = vunpack.c.l.b16 %v484
    %v855 = vunpack.c.h.b16 %v484
    %v856 = vunpack.c.l.b16 %v485
    %v857 = vunpack.c.h.b16 %v485
    %v858 = vunpack.c.l.b16 %v486
    %v859 = vunpack.c.h.b16 %v486
    %v860 = vunpack.c.l.b16 %v487
    %v861 = vunpack.c.h.b16 %v487
    %v862 = vunpack.c.l.b16 %v488
    %v863 = vunpack.c.h.b16 %v488
    %v864 = vunpack.c.l.b16 %v489
    %v865 = vunpack.c.h.b16 %v489
    %v866 = vunpack.c.l.b16 %v490
    %v867 = vunpack.c.h.b16 %v490
    %v868 = vunpack.c.l.b16 %v491
    %v869 = vunpack.c.h.b16 %v491
    %v870 = vunpack.c.l.b16 %v492
    %v871 = vunpack.c.h.b16 %v492
    %v872 = vunpack.c.l.b16 %v493
    %v873 = vunpack.c.h.b16 %v493
    %v874 = vunpack.c.l.b16 %v494
    %v875 = vunpack.c.h.b16 %v494
    %v876 = vunpack.c.l.b16 %v495
    %v877 = vunpack.c.h.b16 %v495
    %v878 = vunpack.c.l.b16 %v496
    %v879 = vunpack.c.h.b16 %v496
    %v880 = vunpack.c.l.b16 %v497
    %v881 = vunpack.c.h.b16 %v497
    %v882 = vunpack.c.l.b16 %v498
    %v883 = vunpack.c.h.b16 %v498
    %v884 = vunpack.c.l.b16 %v499
    %v885 = vunpack.c.h.b16 %v499
    %v886 = vunpack.c.l.b16 %v500
    %v887 = vunpack.c.h.b16 %v500
    %v888 = vunpack.c.l.b16 %v501
    %v889 = vunpack.c.h.b16 %v501
    %v890 = vunpack.c.l.b16 %v502
    %v891 = vunpack.c.h.b16 %v502
    %v892 = vunpack.c.l.b16 %v503
    %v893 = vunpack.c.h.b16 %v503
    %v894 = vunpack.c.l.b16 %v504
    %v895 = vunpack.c.h.b16 %v504
    %v896 = vunpack.c.l.b16 %v505
    %v897 = vunpack.c.h.b16 %v505
    %v898 = vunpack.c.l.b16 %v506
    %v899 = vunpack.c.h.b16 %v506
    %v900 = vunpack.c.l.b16 %v507
    %v901 = vunpack.c.h.b16 %v507
    %v902 = vunpack.c.l.b16 %v508
    %v903 = vunpack.c.h.b16 %v508
    %v904 = vunpack.c.l.b16 %v509
    %v905 = vunpack.c.h.b16 %v509
    %v906 = vunpack.c.l.b16 %v510
    %v907 = vunpack.c.h.b16 %v510
    %v908 = vunpack.c.l.b16 %v511
    %v909 = vunpack.c.h.b16 %v511
    %v910 = vunpack.c.l.b16 %v512
    %v911 = vunpack.c.h.b16 %v512
    %v912 = vunpack.c.l.b16 %v513
    %v913 = vunpack.c.h.b16 %v513
    %v914 = vunpack.c.l.b16 %v514
    %v915 = vunpack.c.h.b16 %v514
    %v916 = vunpack.c.l.b16 %v515
    %v917 = vunpack.c.h.b16 %v515
    %v918 = vunpack.c.l.b16 %v516
    %v919 = vunpack.c.h.b16 %v516
    %v920 = vunpack.c.l.b16 %v517
    %v921 = vunpack.c.h.b16 %v517
    %v922 = vunpack.c.l.b16 %v518
    %v923 = vunpack.c.h.b16 %v518
    %v924 = vunpack.c.l.b16 %v519
    %v925 = vunpack.c.h.b16 %v519
    %v926 = vpack.c.b16 %v674, %v670
    %v927 = vpack.c.b16 %v675, %v671
    %v928 = vpack.c.b16 %v676, %v672
    %v929 = vpack.c.b16 %v677, %v673
    %v930 = vpack.c.b16 %v682, %v678
    %v931 = vpack.c.b16 %v683, %v679
    %v932 = vpack.c.b16 %v684, %v680
    %v933 = vpack.c.b16 %v685, %v681
    %v934 = vpack.c.b16 %v690, %v686
    %v935 = vpack.c.b16 %v691, %v687
    %v936 = vpack.c.b16 %v692, %v688
    %v937 = vpack.c.b16 %v693, %v689
    %v938 = vpack.c.b16 %v698, %v694
    %v939 = vpack.c.b16 %v699, %v695
    %v940 = vpack.c.b16 %v700, %v696
    %v941 = vpack.c.b16 %v701, %v697
    %v942 = vpack.c.b16 %v706, %v702
    %v943 = vpack.c.b16 %v707, %v703
    %v944 = vpack.c.b16 %v708, %v704
    %v945 = vpack.c.b16 %v709, %v705
    %v946 = vpack.c.b16 %v714, %v710
    %v947 = vpack.c.b16 %v715, %v711
    %v948 = vpack.c.b16 %v716, %v712
    %v949 = vpack.c.b16 %v717, %v713
    %v950 = vpack.c.b16 %v722, %v718
    %v951 = vpack.c.b16 %v723, %v719
    %v952 = vpack.c.b16 %v724, %v720
    %v953 = vpack.c.b16 %v725, %v721
    %v954 = vpack.c.b16 %v730, %v726
    %v955 = vpack.c.b16 %v731, %v727
    %v956 = vpack.c.b16 %v732, %v728
    %v957 = vpack.c.b16 %v733, %v729
    %v958 = vpack.c.b16 %v738, %v734
    %v959 = vpack.c.b16 %v739, %v735
    %v960 = vpack.c.b16 %v740, %v736
    %v961 = vpack.c.b16 %v741, %v737
    %v962 = vpack.c.b16 %v746, %v742
    %v963 = vpack.c.b16 %v747, %v743
    %v964 = vpack.c.b16 %v748, %v744
    %v965 = vpack.c.b16 %v749, %v745
    %v966 = vpack.c.b16 %v754, %v750
    %v967 = vpack.c.b16 %v755, %v751
    %v968 = vpack.c.b16 %v756, %v752
    %v969 = vpack.c.b16 %v757, %v753
    %v970 = vpack.c.b16 %v762, %v758
    %v971 = vpack.c.b16 %v763, %v759
    %v972 = vpack.c.b16 %v764, %v760
    %v973 = vpack.c.b16 %v765, %v761
    %v974 = vpack.c.b16 %v770, %v766
    %v975 = vpack.c.b16 %v771, %v767
    %v976 = vpack.c.b16 %v772, %v768
    %v977 = vpack.c.b16 %v773, %v769
    %v978 = vpack.c.b16 %v778, %v774
    %v979 = vpack.c.b16 %v779, %v775
    %v980 = vpack.c.b16 %v780, %v776
    %v981 = vpack.c.b16 %v781, %v777
    %v982 = vpack.c.b16 %v786, %v782
    %v983 = vpack.c.b16 %v787, %v783
    %v984 = vpack.c.b16 %v788, %v784
    %v985 = vpack.c.b16 %v789, %v785
    %v986 = vpack.c.b16 %v794, %v790
    %v987 = vpack.c.b16 %v795, %v791
    %v988 = vpack.c.b16 %v796, %v792
    %v989 = vpack.c.b16 %v797, %v793
    %v990 = vpack.c.b16 %v802, %v798
    %v991 = vpack.c.b16 %v803, %v799
    %v992 = vpack.c.b16 %v804, %v800
    %v993 = vpack.c.b16 %v805, %v801
    %v994 = vpack.c.b16 %v810, %v806
    %v995 = vpack.c.b16 %v811, %v807
    %v996 = vpack.c.b16 %v812, %v808
    %v997 = vpack.c.b16 %v813, %v809
    %v998 = vpack.c.b16 %v818, %v814
    %v999 = vpack.c.b16 %v819, %v815
    %v1000 = vpack.c.b16 %v820, %v816
    %v1001 = vpack.c.b16 %v821, %v817
    %v1002 = vpack.c.b16 %v826, %v822
    %v1003 = vpack.c.b16 %v827, %v823
    %v1004 = vpack.c.b16 %v828, %v824
    %v1005 = vpack.c.b16 %v829, %v825
    %v1006 = vpack.c.b16 %v834, %v830
    %v1007 = vpack.c.b16 %v835, %v831
    %v1008 = vpack.c.b16 %v836, %v832
    %v1009 = vpack.c.b16 %v837, %v833
    %v1010 = vpack.c.b16 %v842, %v838
    %v1011 = vpack.c.b16 %v843, %v839
    %v1012 = vpack.c.b16 %v844, %v840
    %v1013 = vpack.c.b16 %v845, %v841
    %v1014 = vpack.c.b16 %v850, %v846
    %v1015 = vpack.c.b16 %v851, %v847
    %v1016 = vpack.c.b16 %v852, %v848
    %v1017 = vpack.c.b16 %v853, %v849
    %v1018 = vpack.c.b16 %v858, %v854
    %v1019 = vpack.c.b16 %v859, %v855
    %v1020 = vpack.c.b16 %v860, %v856
    %v1021 = vpack.c.b16 %v861, %v857
    %v1022 = vpack.c.b16 %v866, %v862
    %v1023 = vpack.c.b16 %v867, %v863
    %v1024 = vpack.c.b16 %v868, %v864
    %v1025 = vpack.c.b16 %v869, %v865
    %v1026 = vpack.c.b16 %v874, %v870
    %v1027 = vpack.c.b16 %v875, %v871
    %v1028 = vpack.c.b16 %v876, %v872
    %v1029 = vpack.c.b16 %v877, %v873
    %v1030 = vpack.c.b16 %v882, %v878
    %v1031 = vpack.c.b16 %v883, %v879
    %v1032 = vpack.c.b16 %v884, %v880
    %v1033 = vpack.c.b16 %v885, %v881
    %v1034 = vpack.c.b16 %v890, %v886
    %v1035 = vpack.c.b16 %v891, %v887
    %v1036 = vpack.c.b16 %v892, %v888
    %v1037 = vpack.c.b16 %v893, %v889
    %v1038 = vpack.c.b16 %v898, %v894
    %v1039 = vpack.c.b16 %v899, %v895
    %v1040 = vpack.c.b16 %v900, %v896
    %v1041 = vpack.c.b16 %v901, %v897
    %v1042 = vpack.c.b16 %v906, %v902
    %v1043 = vpack.c.b16 %v907, %v903
    %v1044 = vpack.c.b16 %v908, %v904
    %v1045 = vpack.c.b16 %v909, %v905
    %v1046 = vpack.c.b16 %v914, %v910
    %v1047 = vpack.c.b16 %v915, %v911
    %v1048 = vpack.c.b16 %v916, %v912
    %v1049 = vpack.c.b16 %v917, %v913
    %v1050 = vpack.c.b16 %v922, %v918
    %v1051 = vpack.c.b16 %v923, %v919
    %v1052 = vpack.c.b16 %v924, %v920
    %v1053 = vpack.c.b16 %v925, %v921
    %1182 = vmatprep.subr.bf16.mxu0 %v927
    %1183 = vmatpush1.bf16.msra.mxu0 %v926
    %1184 = vmatprep.subr.bf16.mxu0 %v931
    %1185 = vmatpush1.bf16.msra.mxu0 %v930
    %1186 = vmatprep.subr.bf16.mxu0 %v935
    %1187 = vmatpush1.bf16.msra.mxu0 %v934
    %1188 = vmatprep.subr.bf16.mxu0 %v939
    %1189 = vmatpush1.bf16.msra.mxu0 %v938
    %1190 = vmatprep.subr.bf16.mxu0 %v943
    %1191 = vmatpush1.bf16.msra.mxu0 %v942
    %1192 = vmatprep.subr.bf16.mxu0 %v947
    %1193 = vmatpush1.bf16.msra.mxu0 %v946
    %1194 = vmatprep.subr.bf16.mxu0 %v951
    %1195 = vmatpush1.bf16.msra.mxu0 %v950
    %1196 = vmatprep.subr.bf16.mxu0 %v955
    %1197 = vmatpush1.bf16.msra.mxu0 %v954
    %1198 = vmatprep.subr.bf16.mxu0 %v959
    %1199 = vmatpush1.bf16.msra.mxu0 %v958
    %1200 = vmatprep.subr.bf16.mxu0 %v963
    %1201 = vmatpush1.bf16.msra.mxu0 %v962
    %1202 = vmatprep.subr.bf16.mxu0 %v967
    %1203 = vmatpush1.bf16.msra.mxu0 %v966
    %1204 = vmatprep.subr.bf16.mxu0 %v971
    %1205 = vmatpush1.bf16.msra.mxu0 %v970
    %1206 = vmatprep.subr.bf16.mxu0 %v975
    %1207 = vmatpush1.bf16.msra.mxu0 %v974
    %1208 = vmatprep.subr.bf16.mxu0 %v979
    %1209 = vmatpush1.bf16.msra.mxu0 %v978
    %1210 = vmatprep.subr.bf16.mxu0 %v983
    %1211 = vmatpush1.bf16.msra.mxu0 %v982
    %1212 = vmatprep.subr.bf16.mxu0 %v987
    %1213 = vmatpush1.bf16.msra.mxu0 %v986
    %1214 = vmatprep.mubr.bf16.mxu0 %v389
    %1215 = vmatmul.mubr.bf16.gmra.mrb[0].mxu0 %v388
    %v1216 = vpop.f32.mrb[0].mxu0
    %v1217 = vadd.f32 %v525, %v1216
    %v1218 = vpop.f32.mrb[0].mxu0
    %v1219 = vadd.f32 %v529, %v1218
    %v1220 = vpop.f32.mrb[0].mxu0
    %v1221 = vpop.f32.mrb[0].mxu0
    %1222 = vdwg.mxu0
    %1223 = vmatprep.subr.bf16.mxu0 %v991
    %1224 = vmatpush1.bf16.msra.mxu0 %v990
    %1225 = vmatprep.subr.bf16.mxu0 %v995
    %1226 = vmatpush1.bf16.msra.mxu0 %v994
    %1227 = vmatprep.subr.bf16.mxu0 %v999
    %1228 = vmatpush1.bf16.msra.mxu0 %v998
    %1229 = vmatprep.subr.bf16.mxu0 %v1003
    %1230 = vmatpush1.bf16.msra.mxu0 %v1002
    %1231 = vmatprep.subr.bf16.mxu0 %v1007
    %1232 = vmatpush1.bf16.msra.mxu0 %v1006
    %1233 = vmatprep.subr.bf16.mxu0 %v1011
    %1234 = vmatpush1.bf16.msra.mxu0 %v1010
    %1235 = vmatprep.subr.bf16.mxu0 %v1015
    %1236 = vmatpush1.bf16.msra.mxu0 %v1014
    %1237 = vmatprep.subr.bf16.mxu0 %v1019
    %1238 = vmatpush1.bf16.msra.mxu0 %v1018
    %1239 = vmatprep.subr.bf16.mxu0 %v1023
    %1240 = vmatpush1.bf16.msra.mxu0 %v1022
    %1241 = vmatprep.subr.bf16.mxu0 %v1027
    %1242 = vmatpush1.bf16.msra.mxu0 %v1026
    %1243 = vmatprep.subr.bf16.mxu0 %v1031
    %1244 = vmatpush1.bf16.msra.mxu0 %v1030
    %1245 = vmatprep.subr.bf16.mxu0 %v1035
    %1246 = vmatpush1.bf16.msra.mxu0 %v1034
    %1247 = vmatprep.subr.bf16.mxu0 %v1039
    %1248 = vmatpush1.bf16.msra.mxu0 %v1038
    %1249 = vmatprep.subr.bf16.mxu0 %v1043
    %1250 = vmatpush1.bf16.msra.mxu0 %v1042
    %1251 = vmatprep.subr.bf16.mxu0 %v1047
    %1252 = vmatpush1.bf16.msra.mxu0 %v1046
    %1253 = vmatprep.subr.bf16.mxu0 %v1051
    %1254 = vmatpush1.bf16.msra.mxu0 %v1050
    %1255 = vmatprep.mubr.bf16.mxu0 %v391
    %1256 = vmatmul.mubr.bf16.gmra.mrb[0].mxu0 %v390
    %v1257 = vpop.f32.mrb[0].mxu0
    %v1258 = vadd.f32 %v1217, %v1257
    %v1259 = vpop.f32.mrb[0].mxu0
    %v1260 = vadd.f32 %v1219, %v1259
    %v1261 = vpop.f32.mrb[0].mxu0
    %v1262 = vpop.f32.mrb[0].mxu0
    %1263 = vdwg.mxu0
    %1264 = vmatprep.subr.bf16.mxu0 %v929
    %1265 = vmatpush1.bf16.msra.mxu0 %v928
    %1266 = vmatprep.subr.bf16.mxu0 %v933
    %1267 = vmatpush1.bf16.msra.mxu0 %v932
    %1268 = vmatprep.subr.bf16.mxu0 %v937
    %1269 = vmatpush1.bf16.msra.mxu0 %v936
    %1270 = vmatprep.subr.bf16.mxu0 %v941
    %1271 = vmatpush1.bf16.msra.mxu0 %v940
    %1272 = vmatprep.subr.bf16.mxu0 %v945
    %1273 = vmatpush1.bf16.msra.mxu0 %v944
    %1274 = vmatprep.subr.bf16.mxu0 %v949
    %1275 = vmatpush1.bf16.msra.mxu0 %v948
    %1276 = vmatprep.subr.bf16.mxu0 %v953
    %1277 = vmatpush1.bf16.msra.mxu0 %v952
    %1278 = vmatprep.subr.bf16.mxu0 %v957
    %1279 = vmatpush1.bf16.msra.mxu0 %v956
    %1280 = vmatprep.subr.bf16.mxu0 %v961
    %1281 = vmatpush1.bf16.msra.mxu0 %v960
    %1282 = vmatprep.subr.bf16.mxu0 %v965
    %1283 = vmatpush1.bf16.msra.mxu0 %v964
    %1284 = vmatprep.subr.bf16.mxu0 %v969
    %1285 = vmatpush1.bf16.msra.mxu0 %v968
    %1286 = vmatprep.subr.bf16.mxu0 %v973
    %1287 = vmatpush1.bf16.msra.mxu0 %v972
    %1288 = vmatprep.subr.bf16.mxu0 %v977
    %1289 = vmatpush1.bf16.msra.mxu0 %v976
    %1290 = vmatprep.subr.bf16.mxu0 %v981
    %1291 = vmatpush1.bf16.msra.mxu0 %v980
    %1292 = vmatprep.subr.bf16.mxu0 %v985
    %1293 = vmatpush1.bf16.msra.mxu0 %v984
    %1294 = vmatprep.subr.bf16.mxu0 %v989
    %1295 = vmatpush1.bf16.msra.mxu0 %v988
    %1296 = vmatprep.mubr.bf16.mxu0 %v389
    %1297 = vmatmul.mubr.bf16.gmra.mrb[0].mxu0 %v388
    %v1298 = vpop.f32.mrb[0].mxu0
    %v1299 = vadd.f32 %v533, %v1298
    %v1300 = vpop.f32.mrb[0].mxu0
    %v1301 = vadd.f32 %v537, %v1300
    %v1302 = vpop.f32.mrb[0].mxu0
    %v1303 = vpop.f32.mrb[0].mxu0
    %1304 = vdwg.mxu0
    %1305 = vmatprep.subr.bf16.mxu0 %v993
    %1306 = vmatpush1.bf16.msra.mxu0 %v992
    %1307 = vmatprep.subr.bf16.mxu0 %v997
    %1308 = vmatpush1.bf16.msra.mxu0 %v996
    %1309 = vmatprep.subr.bf16.mxu0 %v1001
    %1310 = vmatpush1.bf16.msra.mxu0 %v1000
    %1311 = vmatprep.subr.bf16.mxu0 %v1005
    %1312 = vmatpush1.bf16.msra.mxu0 %v1004
    %1313 = vmatprep.subr.bf16.mxu0 %v1009
    %1314 = vmatpush1.bf16.msra.mxu0 %v1008
    %1315 = vmatprep.subr.bf16.mxu0 %v1013
    %1316 = vmatpush1.bf16.msra.mxu0 %v1012
    %1317 = vmatprep.subr.bf16.mxu0 %v1017
    %1318 = vmatpush1.bf16.msra.mxu0 %v1016
    %1319 = vmatprep.subr.bf16.mxu0 %v1021
    %1320 = vmatpush1.bf16.msra.mxu0 %v1020
    %1321 = vmatprep.subr.bf16.mxu0 %v1025
    %1322 = vmatpush1.bf16.msra.mxu0 %v1024
    %1323 = vmatprep.subr.bf16.mxu0 %v1029
    %1324 = vmatpush1.bf16.msra.mxu0 %v1028
    %1325 = vmatprep.subr.bf16.mxu0 %v1033
    %1326 = vmatpush1.bf16.msra.mxu0 %v1032
    %1327 = vmatprep.subr.bf16.mxu0 %v1037
    %1328 = vmatpush1.bf16.msra.mxu0 %v1036
    %1329 = vmatprep.subr.bf16.mxu0 %v1041
    %1330 = vmatpush1.bf16.msra.mxu0 %v1040
    %1331 = vmatprep.subr.bf16.mxu0 %v1045
    %1332 = vmatpush1.bf16.msra.mxu0 %v1044
    %1333 = vmatprep.subr.bf16.mxu0 %v1049
    %1334 = vmatpush1.bf16.msra.mxu0 %v1048
    %1335 = vmatprep.subr.bf16.mxu0 %v1053
    %1336 = vmatpush1.bf16.msra.mxu0 %v1052
    %1337 = vmatprep.mubr.bf16.mxu0 %v391
    %1338 = vmatmul.mubr.bf16.gmra.mrb[0].mxu0 %v390
    %v1339 = vpop.f32.mrb[0].mxu0
    %v1340 = vadd.f32 %v1299, %v1339
    %v1341 = vpop.f32.mrb[0].mxu0
    %v1342 = vadd.f32 %v1301, %v1341
    %v1343 = vpop.f32.mrb[0].mxu0
    %v1344 = vpop.f32.mrb[0].mxu0
    %1345 = vdwg.mxu0
    %v1346 = vmax.f32 %v1258, 0.0
    %v1347 = vmax.f32 %v1260, 0.0
    %v1348 = vmax.f32 %v1340, 0.0
    %v1349 = vmax.f32 %v1342, 0.0
    %v1350 = vpack.c.bf16 %v1346, %v1346
    %v1351 = vpack.c.bf16 %v1347, %v1347
    %v1352 = vpack.c.bf16 %v1348, %v1348
    %v1353 = vpack.c.bf16 %v1349, %v1349
    %v1354 = vld [vmem:[#allocation8] sm:$0xf]
    %v1355 = vld [vmem:[#allocation8 + $0x4] sm:$0xf]
    %v1356 = vld [vmem:[#allocation8 + $0x8] sm:$0xf]
    %v1357 = vld [vmem:[#allocation8 + $0xc] sm:$0xf]
    %v1358 = vld [vmem:[#allocation8 + $0x10] sm:$0xf]
    %v1359 = vld [vmem:[#allocation8 + $0x14] sm:$0xf]
    %v1360 = vld [vmem:[#allocation8 + $0x18] sm:$0xf]
    %v1361 = vld [vmem:[#allocation8 + $0x1c] sm:$0xf]
    %v1362 = vld [vmem:[#allocation8 + $0x20] sm:$0xf]
    %v1363 = vld [vmem:[#allocation8 + $0x24] sm:$0xf]
    %v1364 = vld [vmem:[#allocation8 + $0x28] sm:$0xf]
    %v1365 = vld [vmem:[#allocation8 + $0x2c] sm:$0xf]
    %v1366 = vld [vmem:[#allocation8 + $0x30] sm:$0xf]
    %v1367 = vld [vmem:[#allocation8 + $0x34] sm:$0xf]
    %v1368 = vld [vmem:[#allocation8 + $0x38] sm:$0xf]
    %v1369 = vld [vmem:[#allocation8 + $0x3c] sm:$0xf]
    %v1370 = vld [vmem:[#allocation8 + $0x40] sm:$0xf]
    %v1371 = vld [vmem:[#allocation8 + $0x44] sm:$0xf]
    %v1372 = vld [vmem:[#allocation8 + $0x48] sm:$0xf]
    %v1373 = vld [vmem:[#allocation8 + $0x4c] sm:$0xf]
    %v1374 = vld [vmem:[#allocation8 + $0x50] sm:$0xf]
    %v1375 = vld [vmem:[#allocation8 + $0x54] sm:$0xf]
    %v1376 = vld [vmem:[#allocation8 + $0x58] sm:$0xf]
    %v1377 = vld [vmem:[#allocation8 + $0x5c] sm:$0xf]
    %v1378 = vld [vmem:[#allocation8 + $0x60] sm:$0xf]
    %v1379 = vld [vmem:[#allocation8 + $0x64] sm:$0xf]
    %v1380 = vld [vmem:[#allocation8 + $0x68] sm:$0xf]
    %v1381 = vld [vmem:[#allocation8 + $0x6c] sm:$0xf]
    %v1382 = vld [vmem:[#allocation8 + $0x70] sm:$0xf]
    %v1383 = vld [vmem:[#allocation8 + $0x74] sm:$0xf]
    %v1384 = vld [vmem:[#allocation8 + $0x78] sm:$0xf]
    %v1385 = vld [vmem:[#allocation8 + $0x7c] sm:$0xf]
    %v1386 = vld [vmem:[#allocation8 + $0x80] sm:$0xf]
    %v1387 = vld [vmem:[#allocation8 + $0x84] sm:$0xf]
    %v1388 = vld [vmem:[#allocation8 + $0x88] sm:$0xf]
    %v1389 = vld [vmem:[#allocation8 + $0x8c] sm:$0xf]
    %v1390 = vld [vmem:[#allocation8 + $0x90] sm:$0xf]
    %v1391 = vld [vmem:[#allocation8 + $0x94] sm:$0xf]
    %v1392 = vld [vmem:[#allocation8 + $0x98] sm:$0xf]
    %v1393 = vld [vmem:[#allocation8 + $0x9c] sm:$0xf]
    %v1394 = vld [vmem:[#allocation8 + $0xa0] sm:$0xf]
    %v1395 = vld [vmem:[#allocation8 + $0xa4] sm:$0xf]
    %v1396 = vld [vmem:[#allocation8 + $0xa8] sm:$0xf]
    %v1397 = vld [vmem:[#allocation8 + $0xac] sm:$0xf]
    %v1398 = vld [vmem:[#allocation8 + $0xb0] sm:$0xf]
    %v1399 = vld [vmem:[#allocation8 + $0xb4] sm:$0xf]
    %v1400 = vld [vmem:[#allocation8 + $0xb8] sm:$0xf]
    %v1401 = vld [vmem:[#allocation8 + $0xbc] sm:$0xf]
    %v1402 = vld [vmem:[#allocation8 + $0xc0] sm:$0xf]
    %v1403 = vld [vmem:[#allocation8 + $0xc4] sm:$0xf]
    %v1404 = vld [vmem:[#allocation8 + $0xc8] sm:$0xf]
    %v1405 = vld [vmem:[#allocation8 + $0xcc] sm:$0xf]
    %v1406 = vld [vmem:[#allocation8 + $0xd0] sm:$0xf]
    %v1407 = vld [vmem:[#allocation8 + $0xd4] sm:$0xf]
    %v1408 = vld [vmem:[#allocation8 + $0xd8] sm:$0xf]
    %v1409 = vld [vmem:[#allocation8 + $0xdc] sm:$0xf]
    %v1410 = vld [vmem:[#allocation8 + $0xe0] sm:$0xf]
    %v1411 = vld [vmem:[#allocation8 + $0xe4] sm:$0xf]
    %v1412 = vld [vmem:[#allocation8 + $0xe8] sm:$0xf]
    %v1413 = vld [vmem:[#allocation8 + $0xec] sm:$0xf]
    %v1414 = vld [vmem:[#allocation8 + $0xf0] sm:$0xf]
    %v1415 = vld [vmem:[#allocation8 + $0xf4] sm:$0xf]
    %v1416 = vld [vmem:[#allocation8 + $0xf8] sm:$0xf]
    %v1417 = vld [vmem:[#allocation8 + $0xfc] sm:$0xf]
    %v1418 = vld [vmem:[%s6] sm:$0x1]
    %v1420 = vlaneseq
    %v1421 = vshrl.u32 %v1420, 7
    %v1422 = vsub.s32 0, %v1421
    %v1423 = vrot.slane %v1418, %v1422
    %v1489 = vunpack.c.l.b16 %v1354
    %v1490 = vunpack.c.l.b16 %v1355
    %v1491 = vunpack.c.l.b16 %v1356
    %v1492 = vunpack.c.l.b16 %v1357
    %v1493 = vunpack.c.l.b16 %v1358
    %v1494 = vunpack.c.l.b16 %v1359
    %v1495 = vunpack.c.l.b16 %v1360
    %v1496 = vunpack.c.l.b16 %v1361
    %v1497 = vunpack.c.l.b16 %v1362
    %v1498 = vunpack.c.l.b16 %v1363
    %v1499 = vunpack.c.l.b16 %v1364
    %v1500 = vunpack.c.l.b16 %v1365
    %v1501 = vunpack.c.l.b16 %v1366
    %v1502 = vunpack.c.l.b16 %v1367
    %v1503 = vunpack.c.l.b16 %v1368
    %v1504 = vunpack.c.l.b16 %v1369
    %v1505 = vunpack.c.l.b16 %v1370
    %v1506 = vunpack.c.l.b16 %v1371
    %v1507 = vunpack.c.l.b16 %v1372
    %v1508 = vunpack.c.l.b16 %v1373
    %v1509 = vunpack.c.l.b16 %v1374
    %v1510 = vunpack.c.l.b16 %v1375
    %v1511 = vunpack.c.l.b16 %v1376
    %v1512 = vunpack.c.l.b16 %v1377
    %v1513 = vunpack.c.l.b16 %v1378
    %v1514 = vunpack.c.l.b16 %v1379
    %v1515 = vunpack.c.l.b16 %v1380
    %v1516 = vunpack.c.l.b16 %v1381
    %v1517 = vunpack.c.l.b16 %v1382
    %v1518 = vunpack.c.l.b16 %v1383
    %v1519 = vunpack.c.l.b16 %v1384
    %v1520 = vunpack.c.l.b16 %v1385
    %v1521 = vunpack.c.l.b16 %v1386
    %v1522 = vunpack.c.l.b16 %v1387
    %v1523 = vunpack.c.l.b16 %v1388
    %v1524 = vunpack.c.l.b16 %v1389
    %v1525 = vunpack.c.l.b16 %v1390
    %v1526 = vunpack.c.l.b16 %v1391
    %v1527 = vunpack.c.l.b16 %v1392
    %v1528 = vunpack.c.l.b16 %v1393
    %v1529 = vunpack.c.l.b16 %v1394
    %v1530 = vunpack.c.l.b16 %v1395
    %v1531 = vunpack.c.l.b16 %v1396
    %v1532 = vunpack.c.l.b16 %v1397
    %v1533 = vunpack.c.l.b16 %v1398
    %v1534 = vunpack.c.l.b16 %v1399
    %v1535 = vunpack.c.l.b16 %v1400
    %v1536 = vunpack.c.l.b16 %v1401
    %v1537 = vunpack.c.l.b16 %v1402
    %v1538 = vunpack.c.l.b16 %v1403
    %v1539 = vunpack.c.l.b16 %v1404
    %v1540 = vunpack.c.l.b16 %v1405
    %v1541 = vunpack.c.l.b16 %v1406
    %v1542 = vunpack.c.l.b16 %v1407
    %v1543 = vunpack.c.l.b16 %v1408
    %v1544 = vunpack.c.l.b16 %v1409
    %v1545 = vunpack.c.l.b16 %v1410
    %v1546 = vunpack.c.l.b16 %v1411
    %v1547 = vunpack.c.l.b16 %v1412
    %v1548 = vunpack.c.l.b16 %v1413
    %v1549 = vunpack.c.l.b16 %v1414
    %v1550 = vunpack.c.l.b16 %v1415
    %v1551 = vunpack.c.l.b16 %v1416
    %v1552 = vunpack.c.l.b16 %v1417
    %v1553 = vpack.c.b16 %v1490, %v1489
    %v1554 = vpack.c.b16 %v1492, %v1491
    %v1555 = vpack.c.b16 %v1494, %v1493
    %v1556 = vpack.c.b16 %v1496, %v1495
    %v1557 = vpack.c.b16 %v1498, %v1497
    %v1558 = vpack.c.b16 %v1500, %v1499
    %v1559 = vpack.c.b16 %v1502, %v1501
    %v1560 = vpack.c.b16 %v1504, %v1503
    %v1561 = vpack.c.b16 %v1506, %v1505
    %v1562 = vpack.c.b16 %v1508, %v1507
    %v1563 = vpack.c.b16 %v1510, %v1509
    %v1564 = vpack.c.b16 %v1512, %v1511
    %v1565 = vpack.c.b16 %v1514, %v1513
    %v1566 = vpack.c.b16 %v1516, %v1515
    %v1567 = vpack.c.b16 %v1518, %v1517
    %v1568 = vpack.c.b16 %v1520, %v1519
    %v1569 = vpack.c.b16 %v1522, %v1521
    %v1570 = vpack.c.b16 %v1524, %v1523
    %v1571 = vpack.c.b16 %v1526, %v1525
    %v1572 = vpack.c.b16 %v1528, %v1527
    %v1573 = vpack.c.b16 %v1530, %v1529
    %v1574 = vpack.c.b16 %v1532, %v1531
    %v1575 = vpack.c.b16 %v1534, %v1533
    %v1576 = vpack.c.b16 %v1536, %v1535
    %v1577 = vpack.c.b16 %v1538, %v1537
    %v1578 = vpack.c.b16 %v1540, %v1539
    %v1579 = vpack.c.b16 %v1542, %v1541
    %v1580 = vpack.c.b16 %v1544, %v1543
    %v1581 = vpack.c.b16 %v1546, %v1545
    %v1582 = vpack.c.b16 %v1548, %v1547
    %v1583 = vpack.c.b16 %v1550, %v1549
    %v1584 = vpack.c.b16 %v1552, %v1551
    %1617 = vmatprep.subr.bf16.mxu0 0
    %1618 = vmatpush1.bf16.msra.mxu0 %v1553
    %1619 = vmatprep.subr.bf16.mxu0 0
    %1620 = vmatpush1.bf16.msra.mxu0 %v1554
    %1621 = vmatprep.subr.bf16.mxu0 0
    %1622 = vmatpush1.bf16.msra.mxu0 %v1555
    %1623 = vmatprep.subr.bf16.mxu0 0
    %1624 = vmatpush1.bf16.msra.mxu0 %v1556
    %1625 = vmatprep.subr.bf16.mxu0 0
    %1626 = vmatpush1.bf16.msra.mxu0 %v1557
    %1627 = vmatprep.subr.bf16.mxu0 0
    %1628 = vmatpush1.bf16.msra.mxu0 %v1558
    %1629 = vmatprep.subr.bf16.mxu0 0
    %1630 = vmatpush1.bf16.msra.mxu0 %v1559
    %1631 = vmatprep.subr.bf16.mxu0 0
    %1632 = vmatpush1.bf16.msra.mxu0 %v1560
    %1633 = vmatprep.subr.bf16.mxu0 0
    %1634 = vmatpush1.bf16.msra.mxu0 %v1561
    %1635 = vmatprep.subr.bf16.mxu0 0
    %1636 = vmatpush1.bf16.msra.mxu0 %v1562
    %1637 = vmatprep.subr.bf16.mxu0 0
    %1638 = vmatpush1.bf16.msra.mxu0 %v1563
    %1639 = vmatprep.subr.bf16.mxu0 0
    %1640 = vmatpush1.bf16.msra.mxu0 %v1564
    %1641 = vmatprep.subr.bf16.mxu0 0
    %1642 = vmatpush1.bf16.msra.mxu0 %v1565
    %1643 = vmatprep.subr.bf16.mxu0 0
    %1644 = vmatpush1.bf16.msra.mxu0 %v1566
    %1645 = vmatprep.subr.bf16.mxu0 0
    %1646 = vmatpush1.bf16.msra.mxu0 %v1567
    %1647 = vmatprep.subr.bf16.mxu0 0
    %1648 = vmatpush1.bf16.msra.mxu0 %v1568
    %1649 = vmatprep.mubr.bf16.mxu0 %v1351
    %1650 = vmatmul.mubr.bf16.gmra.mrb[0].mxu0 %v1350
    %v1651 = vpop.f32.mrb[0].mxu0
    %v1652 = vadd.f32 %v1423, %v1651
    %v1653 = vpop.f32.mrb[0].mxu0
    %v1654 = vpop.f32.mrb[0].mxu0
    %v1655 = vpop.f32.mrb[0].mxu0
    %1656 = vdwg.mxu0
    %1657 = vmatprep.subr.bf16.mxu0 0
    %1658 = vmatpush1.bf16.msra.mxu0 %v1569
    %1659 = vmatprep.subr.bf16.mxu0 0
    %1660 = vmatpush1.bf16.msra.mxu0 %v1570
    %1661 = vmatprep.subr.bf16.mxu0 0
    %1662 = vmatpush1.bf16.msra.mxu0 %v1571
    %1663 = vmatprep.subr.bf16.mxu0 0
    %1664 = vmatpush1.bf16.msra.mxu0 %v1572
    %1665 = vmatprep.subr.bf16.mxu0 0
    %1666 = vmatpush1.bf16.msra.mxu0 %v1573
    %1667 = vmatprep.subr.bf16.mxu0 0
    %1668 = vmatpush1.bf16.msra.mxu0 %v1574
    %1669 = vmatprep.subr.bf16.mxu0 0
    %1670 = vmatpush1.bf16.msra.mxu0 %v1575
    %1671 = vmatprep.subr.bf16.mxu0 0
    %1672 = vmatpush1.bf16.msra.mxu0 %v1576
    %1673 = vmatprep.subr.bf16.mxu0 0
    %1674 = vmatpush1.bf16.msra.mxu0 %v1577
    %1675 = vmatprep.subr.bf16.mxu0 0
    %1676 = vmatpush1.bf16.msra.mxu0 %v1578
    %1677 = vmatprep.subr.bf16.mxu0 0
    %1678 = vmatpush1.bf16.msra.mxu0 %v1579
    %1679 = vmatprep.subr.bf16.mxu0 0
    %1680 = vmatpush1.bf16.msra.mxu0 %v1580
    %1681 = vmatprep.subr.bf16.mxu0 0
    %1682 = vmatpush1.bf16.msra.mxu0 %v1581
    %1683 = vmatprep.subr.bf16.mxu0 0
    %1684 = vmatpush1.bf16.msra.mxu0 %v1582
    %1685 = vmatprep.subr.bf16.mxu0 0
    %1686 = vmatpush1.bf16.msra.mxu0 %v1583
    %1687 = vmatprep.subr.bf16.mxu0 0
    %1688 = vmatpush1.bf16.msra.mxu0 %v1584
    %1689 = vmatprep.mubr.bf16.mxu0 %v1353
    %1690 = vmatmul.mubr.bf16.gmra.mrb[0].mxu0 %v1352
    %v1691 = vpop.f32.mrb[0].mxu0
    %v1692 = vadd.f32 %v1652, %v1691
    %v1693 = vpop.f32.mrb[0].mxu0
    %v1694 = vpop.f32.mrb[0].mxu0
    %v1695 = vpop.f32.mrb[0].mxu0
    %1696 = vdwg.mxu0
    %v1697 = vlaneseq
    %v1698 = vshrl.u32 %v1697, 7
    %vm1699 = vcmp.lt.s32.totalorder %v1698, 8
    %v1700 = vsel %vm1699, 1, 0
    %vm1701 = vcmp.eq.s32.totalorder %v1700, 1
    %v1702 = vsel %vm1701, %v1692, 0.0
    %v1703 = vrot.slane %v1702, 4
    %v1704 = vadd.f32 %v1702, %v1703
    %v1705 = vrot.slane %v1704, 2
    %v1706 = vadd.f32 %v1704, %v1705
    %v1707 = vrot.slane %v1706, 1
    %v1708 = vadd.f32 %v1706, %v1707
    %v1709 = vmul.f32 %v1708, 0.125
    %v1710 = vsub.f32 %v1692, %v1709
    %v1711 = vsel %vm1701, %v1710, 0.0
    %v1712 = vmul.f32 %v1711, %v1711
    %v1713 = vrot.slane %v1712, 4
    %v1714 = vadd.f32 %v1712, %v1713
    %v1715 = vrot.slane %v1714, 2
    %v1716 = vadd.f32 %v1714, %v1715
    %v1717 = vrot.slane %v1716, 1
    %v1718 = vadd.f32 %v1716, %v1717
    %v1719 = vmul.f32 %v1718, 0.125
    %v1720 = vadd.f32 %v1719, 1e-05
    %v1721 = vrsqrt.pop %v1720
    %v1722 = vld [vmem:[%s7] sm:$0x1]
    %v1723 = vmul.f32 %v1722, %v1721
    %v1725 = vlaneseq
    %v1726 = vshrl.u32 %v1725, 7
    %v1727 = vsub.s32 0, %v1726
    %v1728 = vrot.slane %v1723, %v1727
    %v1730 = vmul.f32 %v1710, %v1728
    %v1731 = vld [vmem:[%s8] sm:$0x1]
    %v1733 = vlaneseq
    %v1734 = vshrl.u32 %v1733, 7
    %v1735 = vsub.s32 0, %v1734
    %v1736 = vrot.slane %v1731, %v1735
    %v1738 = vadd.f32 %v1730, %v1736
    %1739 = vst [vmem:[#allocation10] sm:$0xff] %v1738
    // Predicated region
    $region54: #{tpu_custom_call.1} parent=1 // pred_check
      _
    $region55: #{tpu_custom_call.1} parent=1 // pred_check_branch
      %1741 = sbr.rel (0) target = $region57
    $region56: #{tpu_custom_call.1} parent=1 // pred_region
      %s1743 = ssub.s32 128, 128
      %1744 = vsyncadd [#allocation4], %s1743
      %s1746 = sshll.u32 [#allocation10], 4
      %s1747 = int_to_ptr.vmem [resolvable:$true] %s1746
      %1749 = dma.vmem_to_hbm [thread:$0]  %s1747, 128, %s9, [#allocation4]
    $region57: #{tpu_custom_call.1} parent=1 // pred_fallthru
      _
    // Predicated region
    $region58: #{tpu_custom_call.1} parent=1 // pred_check
      _
    $region59: #{tpu_custom_call.1} parent=1 // pred_check_branch
      %1751 = sbr.rel (0) target = $region61
    $region60: #{tpu_custom_call.1} parent=1 // pred_region
      %1752 = dma.done [#allocation4], 128
    $region61: #{tpu_custom_call.1} parent=1 // pred_fallthru
      _
    %1753 = vsyncpa [#allocation3], 1
    %1754 = vsyncpa [#allocation6], 1
    %1755 = vsyncpa [#allocation9], 1
    %1756 = vsyncpa [#allocation4], 1

</llo_original>
